<compile_context>
chip_gen: v7x
topology: tpu7x:2x2x1
jax: 0.10.0
libtpu: 0.0.40
codegen_flags: <defaults>
</compile_context>

<pallas_src>
import functools

import jax
import jax.numpy as jnp
from jax import lax
from jax.experimental import pallas as pl
from jax.experimental.pallas import tpu as pltpu


def _vmem_budget_bytes():
    """Per-core VMEM budget: physical capacity minus ~25% headroom for compiler scratch,
    spills and the double-buffered I/O blocks (v7x: ~48 of 64 MiB; v5e/v6e: ~96 of 128)."""
    cap = 64 * 1024 * 1024  # conservative fallback = v7x physical VMEM
    try:
        cap = int(pltpu.get_tpu_info().vmem_capacity_bytes)
    except Exception:
        pass
    budget = int(cap * 0.75)
    return min(max(budget, 32 * 1024 * 1024), 96 * 1024 * 1024)


def _pick_tile_h(H, W, C, budget, max_tile_h=None):
    """Largest divisor of H whose per-step VMEM estimate fits the budget."""
    Wp = W + 4
    divisors = [d for d in range(H, 0, -1) if H % d == 0]
    if max_tile_h is not None:
        divisors = [d for d in divisors if d <= max_tile_h] or [1]
    for TH in divisors:
        P1 = (TH + 2) * Wp              # conv1 output grid / conv2 input grid
        LxP = (TH + 4) * Wp + 128       # flat input tile (+ tap-slice slack)
        Lo = TH * Wp                    # conv2 output grid
        La = P1 + 128                   # a1 scratch (+ tap-slice slack)
        est = 4 * (2 * C * LxP          # double-buffered input blocks
                   + 2 * C * Lo         # double-buffered output blocks
                   + C * La             # a1 VMEM scratch
                   + 3 * C * P1         # (3C, P1) matmul-operand scratch
                   + C * P1             # dot result before ref accumulation
                   + 2 * (2 * 9 * C * C + 2 * C + P1))   # weights / bias / mask
        est += 2 * 1024 * 1024          # slack for compiler internals
        if est <= budget:
            return TH
    return divisors[-1]


def residual_block_nobn(x, w1, b1, w2, b2, *, max_tile_h=None):
    """ResidualBlock_noBN forward: x + conv2(relu(conv1(x))), 3x3 / stride 1 / pad 1.

    x:      (N, C, H, W) float32 (PyTorch NCHW)
    w1, w2: (C, C, 3, 3) float32 (PyTorch OIHW)
    b1, b2: (C,)         float32
    """
    N, C, H, W = x.shape
    budget = _vmem_budget_bytes()
    TH = _pick_tile_h(H, W, C, budget, max_tile_h)
    T = H // TH
    Wp = W + 4                   # W zero-padded by 2 each side (two chained 3x3 convs)
    P1 = (TH + 2) * Wp           # conv1 is evaluated on a (TH+2, Wp) grid
    Lo = TH * Wp                 # conv2 is evaluated on a (TH, Wp) grid
    Lx = (TH + 4) * Wp           # input tile: TH rows + 2-row halo each side
    LxP = Lx + 128               # slack so every tap slice stays in bounds
    La = P1 + 128
    f32 = jnp.float32

    # ---------------- wrapper-side staging (plain XLA ops) ----------------
    # zero-pad by 2 in H and W, build overlapping row tiles with a 2-row halo and flatten
    # each tile to (C, pixels): lane axis = big pixel axis (lane-dense), sublane axis = C.
    xpad = jnp.pad(x.astype(f32), ((0, 0), (0, 0), (2, 2), (2, 2)))
    rows = jnp.arange(T)[:, None] * TH + jnp.arange(TH + 4)[None, :]       # (T, TH+4)
    xt = xpad[:, :, rows, :]                                               # (N, C, T, TH+4, Wp)
    xt = jnp.transpose(xt, (0, 2, 1, 3, 4)).reshape(N, T, C, Lx)
    xt = jnp.pad(xt, ((0, 0), (0, 0), (0, 0), (0, LxP - Lx)))

    # weights regrouped for the transposed formulation:
    #   wg[ky][co, kx*C + ci] = w[co, ci, ky, kx]   -> one (C, 3C) matrix per kernel row
    def regroup(w):
        return jnp.transpose(w.astype(f32), (2, 0, 3, 1)).reshape(3, C, 3 * C)

    wg1, wg2 = regroup(w1), regroup(w2)
    b1c = b1.astype(f32).reshape(C, 1)
    b2c = b2.astype(f32).reshape(C, 1)

    # conv2-input column mask: original columns outside [0, W) are zero padding.
    colmask = jnp.zeros((Wp,), f32).at[1:W + 1].set(1.0)
    colmask = jnp.tile(colmask, TH + 2).reshape(1, P1)

    def kernel(x_ref, wg1_ref, b1_ref, wg2_ref, b2_ref, mask_ref, o_ref, a1_ref, col_ref):
        t = pl.program_id(1)

        # zero the tap-slice slack tail of the activation scratch (read only by
        # don't-care output columns, zeroed for hygiene; tiny).
        a1_ref[:, P1:] = jnp.zeros((C, La - P1), f32)

        # -------- conv1: 3 MXU dots with K = 3C (one per kernel row ky) --------
        # operand rows are (kx, ci); built from 3 lane-shifted slices of the input ref,
        # stored sublane-aligned / full-lane-width into a reused VMEM scratch.
        for ky in range(3):
            off = ky * Wp
            for kx in range(3):
                col_ref[kx * C:(kx + 1) * C, :] = x_ref[:, off + kx: off + kx + P1]
            contrib = jnp.dot(wg1_ref[ky], col_ref[...], preferred_element_type=f32)
            if ky == 0:
                a1_ref[:, :P1] = contrib
            else:
                a1_ref[:, :P1] += contrib

        # bias + ReLU, then zero the columns that are conv2's W zero-padding.
        a1_ref[:, :P1] = (jnp.maximum(a1_ref[:, :P1] + b1_ref[...], 0.0)
                          * mask_ref[...])

        # rows that are conv2's H zero-padding exist only at the image boundary tiles.
        @pl.when(t == 0)
        def _():
            a1_ref[:, 0:Wp] = jnp.zeros((C, Wp), f32)

        @pl.when(t == pl.num_programs(1) - 1)
        def _():
            a1_ref[:, (TH + 1) * Wp:(TH + 2) * Wp] = jnp.zeros((C, Wp), f32)

        # -------- conv2: same structure, accumulate straight into o_ref (f32) --------
        for ky in range(3):
            off = ky * Wp
            for kx in range(3):
                col_ref[kx * C:(kx + 1) * C, :Lo] = a1_ref[:, off + kx: off + kx + Lo]
            contrib = jnp.dot(wg2_ref[ky], col_ref[:, :Lo], preferred_element_type=f32)
            if ky == 0:
                o_ref[...] = contrib
            else:
                o_ref[...] += contrib

        # bias + residual (identity = central TH x W window of the input tile).
        o_ref[...] = (o_ref[...] + b2_ref[...]
                      + x_ref[:, 2 * Wp + 2: 2 * Wp + 2 + Lo])

    out = pl.pallas_call(
        kernel,
        out_shape=jax.ShapeDtypeStruct((N, T, C, Lo), f32),
        grid_spec=pltpu.PrefetchScalarGridSpec(
            num_scalar_prefetch=0,
            grid=(N, T),
            in_specs=[
                pl.BlockSpec((None, None, C, LxP), lambda n, t: (n, t, 0, 0)),
                pl.BlockSpec((3, C, 3 * C), lambda n, t: (0, 0, 0)),   # resident weights
                pl.BlockSpec((C, 1), lambda n, t: (0, 0)),
                pl.BlockSpec((3, C, 3 * C), lambda n, t: (0, 0, 0)),
                pl.BlockSpec((C, 1), lambda n, t: (0, 0)),
                pl.BlockSpec((1, P1), lambda n, t: (0, 0)),
            ],
            out_specs=pl.BlockSpec((None, None, C, Lo), lambda n, t: (n, t, 0, 0)),
            scratch_shapes=[
                pltpu.VMEM((C, La), f32),        # conv1 activation (conv2 input)
                pltpu.VMEM((3 * C, P1), f32),    # (3C, pixels) matmul operand
            ],
        ),
        compiler_params=pltpu.CompilerParams(
            dimension_semantics=("parallel", "parallel"),
            vmem_limit_bytes=budget,
        ),
    )(xt, wg1, b1c, wg2, b2c, colmask)

    # un-tile: drop the Wp-grid don't-care columns and stitch H back together.
    out = out.reshape(N, T, C, TH, Wp)[:, :, :, :, :W]
    out = jnp.transpose(out, (0, 2, 1, 3, 4)).reshape(N, C, H, W)
    return out.astype(x.dtype)


if __name__ == "__main__":
    key = jax.random.PRNGKey(0)
    nf, N, H, W = 16, 2, 16, 16
    k1, k2, k3, k4, k5 = jax.random.split(key, 5)
    x = jax.random.normal(k1, (N, nf, H, W), jnp.float32)

    # kaiming_normal_(a=0, mode='fan_in') -> std = sqrt(2/fan_in), then *0.1.
    # Use non-zero biases to exercise the conv2 zero-padding path (ReLU(b) != 0 at borders).
    fan_in = nf * 3 * 3
    std = (2.0 / fan_in) ** 0.5
    w1 = jax.random.normal(k2, (nf, nf, 3, 3), jnp.float32) * std * 0.1
    w2 = jax.random.normal(k3, (nf, nf, 3, 3), jnp.float32) * std * 0.1
    b1 = jax.random.normal(k4, (nf,), jnp.float32) * 0.05
    b2 = jax.random.normal(k5, (nf,), jnp.float32) * 0.05

    # default config (single H tile at this size) ...
    out_full = jax.block_until_ready(jax.jit(residual_block_nobn)(x, w1, b1, w2, b2))
    # ... and a forced multi-tile config to exercise the 2-row halo / boundary logic.
    tiled_fn = jax.jit(functools.partial(residual_block_nobn, max_tile_h=8))
    out_tiled = jax.block_until_ready(tiled_fn(x, w1, b1, w2, b2))

    # pure-JAX reference (same math as F.conv2d with padding=1)
    dn = ("NCHW", "OIHW", "NCHW")
    y1 = lax.conv_general_dilated(x, w1, (1, 1), "SAME", dimension_numbers=dn)
    y1 = jnp.maximum(y1 + b1[None, :, None, None], 0.0)
    y2 = lax.conv_general_dilated(y1, w2, (1, 1), "SAME", dimension_numbers=dn)
    ref = x + y2 + b2[None, :, None, None]

    assert out_full.shape == x.shape and out_full.dtype == x.dtype
    assert jnp.allclose(out_full, ref, atol=1e-4, rtol=1e-4), "single-tile mismatch"
    assert jnp.allclose(out_tiled, ref, atol=1e-4, rtol=1e-4), "H-tiled (halo) mismatch"
    print("KERNEL_OK")
</pallas_src>

<mosaic_0001>
module attributes {stable_mosaic.version = 11 : i64} {
  func.func @kernel(%arg0: i32, %arg1: i32, %arg2: memref<1x1x16x528xf32, #tpu.memory_space<vmem>>, %arg3: memref<3x16x48xf32, #tpu.memory_space<vmem>>, %arg4: memref<16x1xf32, #tpu.memory_space<vmem>>, %arg5: memref<3x16x48xf32, #tpu.memory_space<vmem>>, %arg6: memref<16x1xf32, #tpu.memory_space<vmem>>, %arg7: memref<1x360xf32, #tpu.memory_space<vmem>>, %arg8: memref<1x1x16x320xf32, #tpu.memory_space<vmem>>, %arg9: memref<16x488xf32, #tpu.memory_space<vmem>>, %arg10: memref<48x360xf32, #tpu.memory_space<vmem>>) attributes {dimension_semantics = [#tpu.dimension_semantics<parallel>, #tpu.dimension_semantics<parallel>], iteration_bounds = array<i64: 2, 1>, scalar_prefetch = 0 : i64, scratch_operands = 2 : i64, tpu.core_type = #tpu.core_type<tc>, window_params = [{transform_indices = @transform_0, window_bounds = array<i64: 1, 1, 16, 528>}, {pipeline_mode = #tpu.pipeline_mode<synchronous>, transform_indices = @transform_1, window_bounds = array<i64: 3, 16, 48>}, {pipeline_mode = #tpu.pipeline_mode<synchronous>, transform_indices = @transform_2, window_bounds = array<i64: 16, 1>}, {pipeline_mode = #tpu.pipeline_mode<synchronous>, transform_indices = @transform_3, window_bounds = array<i64: 3, 16, 48>}, {pipeline_mode = #tpu.pipeline_mode<synchronous>, transform_indices = @transform_4, window_bounds = array<i64: 16, 1>}, {pipeline_mode = #tpu.pipeline_mode<synchronous>, transform_indices = @transform_5, window_bounds = array<i64: 1, 360>}, {transform_indices = @transform_6, window_bounds = array<i64: 1, 1, 16, 320>}]} {
    %cst = arith.constant 0.000000e+00 : f32
    %0 = vector.broadcast %cst : f32 to vector<16x128xf32>
    %c0 = arith.constant 0 : index
    %c360 = arith.constant 360 : index
    %1 = vector.load %arg9[%c0, %c360] : memref<16x488xf32, #tpu.memory_space<vmem>>, vector<16x128xf32>
    tpu.vector_store %arg9[%c0, %c360], %0 {strides = array<i32>} : memref<16x488xf32, #tpu.memory_space<vmem>>, vector<16x128xf32>,
    %c0_0 = arith.constant 0 : index
    %c0_1 = arith.constant 0 : index
    %c0_2 = arith.constant 0 : index
    %c0_3 = arith.constant 0 : index
    %2 = vector.load %arg2[%c0_0, %c0_1, %c0_2, %c0_3] : memref<1x1x16x528xf32, #tpu.memory_space<vmem>>, vector<1x1x16x360xf32>
    %3 = vector.shape_cast %2 : vector<1x1x16x360xf32> to vector<16x360xf32>
    %c0_4 = arith.constant 0 : index
    %c0_5 = arith.constant 0 : index
    %4 = vector.load %arg10[%c0_4, %c0_5] : memref<48x360xf32, #tpu.memory_space<vmem>>, vector<16x360xf32>
    tpu.vector_store %arg10[%c0_4, %c0_5], %3 {strides = array<i32>} : memref<48x360xf32, #tpu.memory_space<vmem>>, vector<16x360xf32>,
    %c0_6 = arith.constant 0 : index
    %c0_7 = arith.constant 0 : index
    %c0_8 = arith.constant 0 : index
    %c1 = arith.constant 1 : index
    %5 = vector.load %arg2[%c0_6, %c0_7, %c0_8, %c1] : memref<1x1x16x528xf32, #tpu.memory_space<vmem>>, vector<1x1x16x360xf32>
    %6 = vector.shape_cast %5 : vector<1x1x16x360xf32> to vector<16x360xf32>
    %c16 = arith.constant 16 : index
    %c0_9 = arith.constant 0 : index
    %7 = vector.load %arg10[%c16, %c0_9] : memref<48x360xf32, #tpu.memory_space<vmem>>, vector<16x360xf32>
    tpu.vector_store %arg10[%c16, %c0_9], %6 {strides = array<i32>} : memref<48x360xf32, #tpu.memory_space<vmem>>, vector<16x360xf32>,
    %c0_10 = arith.constant 0 : index
    %c0_11 = arith.constant 0 : index
    %c0_12 = arith.constant 0 : index
    %c2 = arith.constant 2 : index
    %8 = vector.load %arg2[%c0_10, %c0_11, %c0_12, %c2] : memref<1x1x16x528xf32, #tpu.memory_space<vmem>>, vector<1x1x16x360xf32>
    %9 = vector.shape_cast %8 : vector<1x1x16x360xf32> to vector<16x360xf32>
    %c32 = arith.constant 32 : index
    %c0_13 = arith.constant 0 : index
    %10 = vector.load %arg10[%c32, %c0_13] : memref<48x360xf32, #tpu.memory_space<vmem>>, vector<16x360xf32>
    tpu.vector_store %arg10[%c32, %c0_13], %9 {strides = array<i32>} : memref<48x360xf32, #tpu.memory_space<vmem>>, vector<16x360xf32>,
    %c0_14 = arith.constant 0 : index
    %c0_15 = arith.constant 0 : index
    %c0_16 = arith.constant 0 : index
    %11 = vector.load %arg3[%c0_14, %c0_15, %c0_16] : memref<3x16x48xf32, #tpu.memory_space<vmem>>, vector<1x16x48xf32>
    %12 = vector.shape_cast %11 : vector<1x16x48xf32> to vector<16x48xf32>
    %c0_17 = arith.constant 0 : index
    %c0_18 = arith.constant 0 : index
    %13 = vector.load %arg10[%c0_17, %c0_18] : memref<48x360xf32, #tpu.memory_space<vmem>>, vector<48x360xf32>
    %cst_19 = arith.constant dense<0.000000e+00> : vector<16x360xf32>
    %14 = tpu.matmul %12, %13, %cst_19 {dimension_numbers = #tpu.dot_dimension_numbers<[1], [0], [0], [1], [0, 0, 1, 1], [], []>} : vector<16x48xf32>, vector<48x360xf32>, vector<16x360xf32> -> vector<16x360xf32>
    %c0_20 = arith.constant 0 : index
    %c0_21 = arith.constant 0 : index
    %15 = vector.load %arg9[%c0_20, %c0_21] : memref<16x488xf32, #tpu.memory_space<vmem>>, vector<16x360xf32>
    tpu.vector_store %arg9[%c0_20, %c0_21], %14 {strides = array<i32>} : memref<16x488xf32, #tpu.memory_space<vmem>>, vector<16x360xf32>,
    %c0_22 = arith.constant 0 : index
    %c0_23 = arith.constant 0 : index
    %c0_24 = arith.constant 0 : index
    %c20 = arith.constant 20 : index
    %16 = vector.load %arg2[%c0_22, %c0_23, %c0_24, %c20] : memref<1x1x16x528xf32, #tpu.memory_space<vmem>>, vector<1x1x16x360xf32>
    %17 = vector.shape_cast %16 : vector<1x1x16x360xf32> to vector<16x360xf32>
    %c0_25 = arith.constant 0 : index
    %c0_26 = arith.constant 0 : index
    %18 = vector.load %arg10[%c0_25, %c0_26] : memref<48x360xf32, #tpu.memory_space<vmem>>, vector<16x360xf32>
    tpu.vector_store %arg10[%c0_25, %c0_26], %17 {strides = array<i32>} : memref<48x360xf32, #tpu.memory_space<vmem>>, vector<16x360xf32>,
    %c0_27 = arith.constant 0 : index
    %c0_28 = arith.constant 0 : index
    %c0_29 = arith.constant 0 : index
    %c21 = arith.constant 21 : index
    %19 = vector.load %arg2[%c0_27, %c0_28, %c0_29, %c21] : memref<1x1x16x528xf32, #tpu.memory_space<vmem>>, vector<1x1x16x360xf32>
    %20 = vector.shape_cast %19 : vector<1x1x16x360xf32> to vector<16x360xf32>
    %c16_30 = arith.constant 16 : index
    %c0_31 = arith.constant 0 : index
    %21 = vector.load %arg10[%c16_30, %c0_31] : memref<48x360xf32, #tpu.memory_space<vmem>>, vector<16x360xf32>
    tpu.vector_store %arg10[%c16_30, %c0_31], %20 {strides = array<i32>} : memref<48x360xf32, #tpu.memory_space<vmem>>, vector<16x360xf32>,
    %c0_32 = arith.constant 0 : index
    %c0_33 = arith.constant 0 : index
    %c0_34 = arith.constant 0 : index
    %c22 = arith.constant 22 : index
    %22 = vector.load %arg2[%c0_32, %c0_33, %c0_34, %c22] : memref<1x1x16x528xf32, #tpu.memory_space<vmem>>, vector<1x1x16x360xf32>
    %23 = vector.shape_cast %22 : vector<1x1x16x360xf32> to vector<16x360xf32>
    %c32_35 = arith.constant 32 : index
    %c0_36 = arith.constant 0 : index
    %24 = vector.load %arg10[%c32_35, %c0_36] : memref<48x360xf32, #tpu.memory_space<vmem>>, vector<16x360xf32>
    tpu.vector_store %arg10[%c32_35, %c0_36], %23 {strides = array<i32>} : memref<48x360xf32, #tpu.memory_space<vmem>>, vector<16x360xf32>,
    %c1_37 = arith.constant 1 : index
    %c0_38 = arith.constant 0 : index
    %c0_39 = arith.constant 0 : index
    %25 = vector.load %arg3[%c1_37, %c0_38, %c0_39] : memref<3x16x48xf32, #tpu.memory_space<vmem>>, vector<1x16x48xf32>
    %26 = vector.shape_cast %25 : vector<1x16x48xf32> to vector<16x48xf32>
    %c0_40 = arith.constant 0 : index
    %c0_41 = arith.constant 0 : index
    %27 = vector.load %arg10[%c0_40, %c0_41] : memref<48x360xf32, #tpu.memory_space<vmem>>, vector<48x360xf32>
    %cst_42 = arith.constant dense<0.000000e+00> : vector<16x360xf32>
    %28 = tpu.matmul %26, %27, %cst_42 {dimension_numbers = #tpu.dot_dimension_numbers<[1], [0], [0], [1], [0, 0, 1, 1], [], []>} : vector<16x48xf32>, vector<48x360xf32>, vector<16x360xf32> -> vector<16x360xf32>
    %c0_43 = arith.constant 0 : index
    %c0_44 = arith.constant 0 : index
    %29 = vector.load %arg9[%c0_43, %c0_44] : memref<16x488xf32, #tpu.memory_space<vmem>>, vector<16x360xf32>
    %30 = arith.addf %29, %28 : vector<16x360xf32>
    %c0_45 = arith.constant 0 : index
    %c0_46 = arith.constant 0 : index
    %31 = vector.load %arg9[%c0_45, %c0_46] : memref<16x488xf32, #tpu.memory_space<vmem>>, vector<16x360xf32>
    tpu.vector_store %arg9[%c0_45, %c0_46], %30 {strides = array<i32>} : memref<16x488xf32, #tpu.memory_space<vmem>>, vector<16x360xf32>,
    %c0_47 = arith.constant 0 : index
    %c0_48 = arith.constant 0 : index
    %c0_49 = arith.constant 0 : index
    %c40 = arith.constant 40 : index
    %32 = vector.load %arg2[%c0_47, %c0_48, %c0_49, %c40] : memref<1x1x16x528xf32, #tpu.memory_space<vmem>>, vector<1x1x16x360xf32>
    %33 = vector.shape_cast %32 : vector<1x1x16x360xf32> to vector<16x360xf32>
    %c0_50 = arith.constant 0 : index
    %c0_51 = arith.constant 0 : index
    %34 = vector.load %arg10[%c0_50, %c0_51] : memref<48x360xf32, #tpu.memory_space<vmem>>, vector<16x360xf32>
    tpu.vector_store %arg10[%c0_50, %c0_51], %33 {strides = array<i32>} : memref<48x360xf32, #tpu.memory_space<vmem>>, vector<16x360xf32>,
    %c0_52 = arith.constant 0 : index
    %c0_53 = arith.constant 0 : index
    %c0_54 = arith.constant 0 : index
    %c41 = arith.constant 41 : index
    %35 = vector.load %arg2[%c0_52, %c0_53, %c0_54, %c41] : memref<1x1x16x528xf32, #tpu.memory_space<vmem>>, vector<1x1x16x360xf32>
    %36 = vector.shape_cast %35 : vector<1x1x16x360xf32> to vector<16x360xf32>
    %c16_55 = arith.constant 16 : index
    %c0_56 = arith.constant 0 : index
    %37 = vector.load %arg10[%c16_55, %c0_56] : memref<48x360xf32, #tpu.memory_space<vmem>>, vector<16x360xf32>
    tpu.vector_store %arg10[%c16_55, %c0_56], %36 {strides = array<i32>} : memref<48x360xf32, #tpu.memory_space<vmem>>, vector<16x360xf32>,
    %c0_57 = arith.constant 0 : index
    %c0_58 = arith.constant 0 : index
    %c0_59 = arith.constant 0 : index
    %c42 = arith.constant 42 : index
    %38 = vector.load %arg2[%c0_57, %c0_58, %c0_59, %c42] : memref<1x1x16x528xf32, #tpu.memory_space<vmem>>, vector<1x1x16x360xf32>
    %39 = vector.shape_cast %38 : vector<1x1x16x360xf32> to vector<16x360xf32>
    %c32_60 = arith.constant 32 : index
    %c0_61 = arith.constant 0 : index
    %40 = vector.load %arg10[%c32_60, %c0_61] : memref<48x360xf32, #tpu.memory_space<vmem>>, vector<16x360xf32>
    tpu.vector_store %arg10[%c32_60, %c0_61], %39 {strides = array<i32>} : memref<48x360xf32, #tpu.memory_space<vmem>>, vector<16x360xf32>,
    %c2_62 = arith.constant 2 : index
    %c0_63 = arith.constant 0 : index
    %c0_64 = arith.constant 0 : index
    %41 = vector.load %arg3[%c2_62, %c0_63, %c0_64] : memref<3x16x48xf32, #tpu.memory_space<vmem>>, vector<1x16x48xf32>
    %42 = vector.shape_cast %41 : vector<1x16x48xf32> to vector<16x48xf32>
    %c0_65 = arith.constant 0 : index
    %c0_66 = arith.constant 0 : index
    %43 = vector.load %arg10[%c0_65, %c0_66] : memref<48x360xf32, #tpu.memory_space<vmem>>, vector<48x360xf32>
    %cst_67 = arith.constant dense<0.000000e+00> : vector<16x360xf32>
    %44 = tpu.matmul %42, %43, %cst_67 {dimension_numbers = #tpu.dot_dimension_numbers<[1], [0], [0], [1], [0, 0, 1, 1], [], []>} : vector<16x48xf32>, vector<48x360xf32>, vector<16x360xf32> -> vector<16x360xf32>
    %c0_68 = arith.constant 0 : index
    %c0_69 = arith.constant 0 : index
    %45 = vector.load %arg9[%c0_68, %c0_69] : memref<16x488xf32, #tpu.memory_space<vmem>>, vector<16x360xf32>
    %46 = arith.addf %45, %44 : vector<16x360xf32>
    %c0_70 = arith.constant 0 : index
    %c0_71 = arith.constant 0 : index
    %47 = vector.load %arg9[%c0_70, %c0_71] : memref<16x488xf32, #tpu.memory_space<vmem>>, vector<16x360xf32>
    tpu.vector_store %arg9[%c0_70, %c0_71], %46 {strides = array<i32>} : memref<16x488xf32, #tpu.memory_space<vmem>>, vector<16x360xf32>,
    %c0_72 = arith.constant 0 : index
    %c0_73 = arith.constant 0 : index
    %48 = vector.load %arg9[%c0_72, %c0_73] : memref<16x488xf32, #tpu.memory_space<vmem>>, vector<16x360xf32>
    %c0_74 = arith.constant 0 : index
    %c0_75 = arith.constant 0 : index
    %49 = vector.load %arg4[%c0_74, %c0_75] : memref<16x1xf32, #tpu.memory_space<vmem>>, vector<16x1xf32>
    %50 = vector.broadcast %49 : vector<16x1xf32> to vector<16x360xf32>
    %51 = arith.addf %48, %50 : vector<16x360xf32>
    %cst_76 = arith.constant 0.000000e+00 : f32
    %52 = vector.broadcast %cst_76 : f32 to vector<16x360xf32>
    %53 = arith.maximumf %51, %52 : vector<16x360xf32>
    %c0_77 = arith.constant 0 : index
    %c0_78 = arith.constant 0 : index
    %54 = vector.load %arg7[%c0_77, %c0_78] : memref<1x360xf32, #tpu.memory_space<vmem>>, vector<1x360xf32>
    %55 = vector.broadcast %54 : vector<1x360xf32> to vector<16x360xf32>
    %56 = arith.mulf %53, %55 : vector<16x360xf32>
    %c0_79 = arith.constant 0 : index
    %c0_80 = arith.constant 0 : index
    %57 = vector.load %arg9[%c0_79, %c0_80] : memref<16x488xf32, #tpu.memory_space<vmem>>, vector<16x360xf32>
    tpu.vector_store %arg9[%c0_79, %c0_80], %56 {strides = array<i32>} : memref<16x488xf32, #tpu.memory_space<vmem>>, vector<16x360xf32>,
    %c0_i32 = arith.constant 0 : i32
    %58 = arith.cmpi eq, %arg1, %c0_i32 : i32
    %59 = arith.extui %58 : i1 to i32
    %c0_i32_81 = arith.constant 0 : i32
    %60 = arith.cmpi ne, %59, %c0_i32_81 : i32
    scf.if %60 {
      %cst_172 = arith.constant 0.000000e+00 : f32
      %120 = vector.broadcast %cst_172 : f32 to vector<16x20xf32>
      %c0_173 = arith.constant 0 : index
      %c0_174 = arith.constant 0 : index
      %121 = vector.load %arg9[%c0_173, %c0_174] : memref<16x488xf32, #tpu.memory_space<vmem>>, vector<16x20xf32>
      tpu.vector_store %arg9[%c0_173, %c0_174], %120 {strides = array<i32>} : memref<16x488xf32, #tpu.memory_space<vmem>>, vector<16x20xf32>,
    } else {
    }
    %c0_i32_82 = arith.constant 0 : i32
    %61 = arith.cmpi eq, %arg1, %c0_i32_82 : i32
    %62 = arith.extui %61 : i1 to i32
    %c0_i32_83 = arith.constant 0 : i32
    %63 = arith.cmpi ne, %62, %c0_i32_83 : i32
    scf.if %63 {
      %cst_172 = arith.constant 0.000000e+00 : f32
      %120 = vector.broadcast %cst_172 : f32 to vector<16x20xf32>
      %c0_173 = arith.constant 0 : index
      %c340 = arith.constant 340 : index
      %121 = vector.load %arg9[%c0_173, %c340] : memref<16x488xf32, #tpu.memory_space<vmem>>, vector<16x20xf32>
      tpu.vector_store %arg9[%c0_173, %c340], %120 {strides = array<i32>} : memref<16x488xf32, #tpu.memory_space<vmem>>, vector<16x20xf32>,
    } else {
    }
    %c0_84 = arith.constant 0 : index
    %c0_85 = arith.constant 0 : index
    %64 = vector.load %arg9[%c0_84, %c0_85] : memref<16x488xf32, #tpu.memory_space<vmem>>, vector<16x320xf32>
    %c0_86 = arith.constant 0 : index
    %c0_87 = arith.constant 0 : index
    %65 = vector.load %arg10[%c0_86, %c0_87] : memref<48x360xf32, #tpu.memory_space<vmem>>, vector<16x320xf32>
    tpu.vector_store %arg10[%c0_86, %c0_87], %64 {strides = array<i32>} : memref<48x360xf32, #tpu.memory_space<vmem>>, vector<16x320xf32>,
    %c0_88 = arith.constant 0 : index
    %c1_89 = arith.constant 1 : index
    %66 = vector.load %arg9[%c0_88, %c1_89] : memref<16x488xf32, #tpu.memory_space<vmem>>, vector<16x320xf32>
    %c16_90 = arith.constant 16 : index
    %c0_91 = arith.constant 0 : index
    %67 = vector.load %arg10[%c16_90, %c0_91] : memref<48x360xf32, #tpu.memory_space<vmem>>, vector<16x320xf32>
    tpu.vector_store %arg10[%c16_90, %c0_91], %66 {strides = array<i32>} : memref<48x360xf32, #tpu.memory_space<vmem>>, vector<16x320xf32>,
    %c0_92 = arith.constant 0 : index
    %c2_93 = arith.constant 2 : index
    %68 = vector.load %arg9[%c0_92, %c2_93] : memref<16x488xf32, #tpu.memory_space<vmem>>, vector<16x320xf32>
    %c32_94 = arith.constant 32 : index
    %c0_95 = arith.constant 0 : index
    %69 = vector.load %arg10[%c32_94, %c0_95] : memref<48x360xf32, #tpu.memory_space<vmem>>, vector<16x320xf32>
    tpu.vector_store %arg10[%c32_94, %c0_95], %68 {strides = array<i32>} : memref<48x360xf32, #tpu.memory_space<vmem>>, vector<16x320xf32>,
    %c0_96 = arith.constant 0 : index
    %c0_97 = arith.constant 0 : index
    %c0_98 = arith.constant 0 : index
    %70 = vector.load %arg5[%c0_96, %c0_97, %c0_98] : memref<3x16x48xf32, #tpu.memory_space<vmem>>, vector<1x16x48xf32>
    %71 = vector.shape_cast %70 : vector<1x16x48xf32> to vector<16x48xf32>
    %c0_99 = arith.constant 0 : index
    %c0_100 = arith.constant 0 : index
    %72 = vector.load %arg10[%c0_99, %c0_100] : memref<48x360xf32, #tpu.memory_space<vmem>>, vector<48x320xf32>
    %cst_101 = arith.constant dense<0.000000e+00> : vector<16x320xf32>
    %73 = tpu.matmul %71, %72, %cst_101 {dimension_numbers = #tpu.dot_dimension_numbers<[1], [0], [0], [1], [0, 0, 1, 1], [], []>} : vector<16x48xf32>, vector<48x320xf32>, vector<16x320xf32> -> vector<16x320xf32>
    %c0_102 = arith.constant 0 : index
    %c0_103 = arith.constant 0 : index
    %c0_104 = arith.constant 0 : index
    %c0_105 = arith.constant 0 : index
    %74 = vector.load %arg8[%c0_102, %c0_103, %c0_104, %c0_105] : memref<1x1x16x320xf32, #tpu.memory_space<vmem>>, vector<1x1x16x320xf32>
    %75 = vector.shape_cast %74 : vector<1x1x16x320xf32> to vector<16x320xf32>
    %76 = vector.shape_cast %73 : vector<16x320xf32> to vector<1x1x16x320xf32>
    tpu.vector_store %arg8[%c0_102, %c0_103, %c0_104, %c0_105], %76 {strides = array<i32>} : memref<1x1x16x320xf32, #tpu.memory_space<vmem>>, vector<1x1x16x320xf32>,
    %c0_106 = arith.constant 0 : index
    %c20_107 = arith.constant 20 : index
    %77 = vector.load %arg9[%c0_106, %c20_107] : memref<16x488xf32, #tpu.memory_space<vmem>>, vector<16x320xf32>
    %c0_108 = arith.constant 0 : index
    %c0_109 = arith.constant 0 : index
    %78 = vector.load %arg10[%c0_108, %c0_109] : memref<48x360xf32, #tpu.memory_space<vmem>>, vector<16x320xf32>
    tpu.vector_store %arg10[%c0_108, %c0_109], %77 {strides = array<i32>} : memref<48x360xf32, #tpu.memory_space<vmem>>, vector<16x320xf32>,
    %c0_110 = arith.constant 0 : index
    %c21_111 = arith.constant 21 : index
    %79 = vector.load %arg9[%c0_110, %c21_111] : memref<16x488xf32, #tpu.memory_space<vmem>>, vector<16x320xf32>
    %c16_112 = arith.constant 16 : index
    %c0_113 = arith.constant 0 : index
    %80 = vector.load %arg10[%c16_112, %c0_113] : memref<48x360xf32, #tpu.memory_space<vmem>>, vector<16x320xf32>
    tpu.vector_store %arg10[%c16_112, %c0_113], %79 {strides = array<i32>} : memref<48x360xf32, #tpu.memory_space<vmem>>, vector<16x320xf32>,
    %c0_114 = arith.constant 0 : index
    %c22_115 = arith.constant 22 : index
    %81 = vector.load %arg9[%c0_114, %c22_115] : memref<16x488xf32, #tpu.memory_space<vmem>>, vector<16x320xf32>
    %c32_116 = arith.constant 32 : index
    %c0_117 = arith.constant 0 : index
    %82 = vector.load %arg10[%c32_116, %c0_117] : memref<48x360xf32, #tpu.memory_space<vmem>>, vector<16x320xf32>
    tpu.vector_store %arg10[%c32_116, %c0_117], %81 {strides = array<i32>} : memref<48x360xf32, #tpu.memory_space<vmem>>, vector<16x320xf32>,
    %c1_118 = arith.constant 1 : index
    %c0_119 = arith.constant 0 : index
    %c0_120 = arith.constant 0 : index
    %83 = vector.load %arg5[%c1_118, %c0_119, %c0_120] : memref<3x16x48xf32, #tpu.memory_space<vmem>>, vector<1x16x48xf32>
    %84 = vector.shape_cast %83 : vector<1x16x48xf32> to vector<16x48xf32>
    %c0_121 = arith.constant 0 : index
    %c0_122 = arith.constant 0 : index
    %85 = vector.load %arg10[%c0_121, %c0_122] : memref<48x360xf32, #tpu.memory_space<vmem>>, vector<48x320xf32>
    %cst_123 = arith.constant dense<0.000000e+00> : vector<16x320xf32>
    %86 = tpu.matmul %84, %85, %cst_123 {dimension_numbers = #tpu.dot_dimension_numbers<[1], [0], [0], [1], [0, 0, 1, 1], [], []>} : vector<16x48xf32>, vector<48x320xf32>, vector<16x320xf32> -> vector<16x320xf32>
    %c0_124 = arith.constant 0 : index
    %c0_125 = arith.constant 0 : index
    %c0_126 = arith.constant 0 : index
    %c0_127 = arith.constant 0 : index
    %87 = vector.load %arg8[%c0_124, %c0_125, %c0_126, %c0_127] : memref<1x1x16x320xf32, #tpu.memory_space<vmem>>, vector<1x1x16x320xf32>
    %88 = vector.shape_cast %87 : vector<1x1x16x320xf32> to vector<16x320xf32>
    %89 = arith.addf %88, %86 : vector<16x320xf32>
    %c0_128 = arith.constant 0 : index
    %c0_129 = arith.constant 0 : index
    %c0_130 = arith.constant 0 : index
    %c0_131 = arith.constant 0 : index
    %90 = vector.load %arg8[%c0_128, %c0_129, %c0_130, %c0_131] : memref<1x1x16x320xf32, #tpu.memory_space<vmem>>, vector<1x1x16x320xf32>
    %91 = vector.shape_cast %90 : vector<1x1x16x320xf32> to vector<16x320xf32>
    %92 = vector.shape_cast %89 : vector<16x320xf32> to vector<1x1x16x320xf32>
    tpu.vector_store %arg8[%c0_128, %c0_129, %c0_130, %c0_131], %92 {strides = array<i32>} : memref<1x1x16x320xf32, #tpu.memory_space<vmem>>, vector<1x1x16x320xf32>,
    %c0_132 = arith.constant 0 : index
    %c40_133 = arith.constant 40 : index
    %93 = vector.load %arg9[%c0_132, %c40_133] : memref<16x488xf32, #tpu.memory_space<vmem>>, vector<16x320xf32>
    %c0_134 = arith.constant 0 : index
    %c0_135 = arith.constant 0 : index
    %94 = vector.load %arg10[%c0_134, %c0_135] : memref<48x360xf32, #tpu.memory_space<vmem>>, vector<16x320xf32>
    tpu.vector_store %arg10[%c0_134, %c0_135], %93 {strides = array<i32>} : memref<48x360xf32, #tpu.memory_space<vmem>>, vector<16x320xf32>,
    %c0_136 = arith.constant 0 : index
    %c41_137 = arith.constant 41 : index
    %95 = vector.load %arg9[%c0_136, %c41_137] : memref<16x488xf32, #tpu.memory_space<vmem>>, vector<16x320xf32>
    %c16_138 = arith.constant 16 : index
    %c0_139 = arith.constant 0 : index
    %96 = vector.load %arg10[%c16_138, %c0_139] : memref<48x360xf32, #tpu.memory_space<vmem>>, vector<16x320xf32>
    tpu.vector_store %arg10[%c16_138, %c0_139], %95 {strides = array<i32>} : memref<48x360xf32, #tpu.memory_space<vmem>>, vector<16x320xf32>,
    %c0_140 = arith.constant 0 : index
    %c42_141 = arith.constant 42 : index
    %97 = vector.load %arg9[%c0_140, %c42_141] : memref<16x488xf32, #tpu.memory_space<vmem>>, vector<16x320xf32>
    %c32_142 = arith.constant 32 : index
    %c0_143 = arith.constant 0 : index
    %98 = vector.load %arg10[%c32_142, %c0_143] : memref<48x360xf32, #tpu.memory_space<vmem>>, vector<16x320xf32>
    tpu.vector_store %arg10[%c32_142, %c0_143], %97 {strides = array<i32>} : memref<48x360xf32, #tpu.memory_space<vmem>>, vector<16x320xf32>,
    %c2_144 = arith.constant 2 : index
    %c0_145 = arith.constant 0 : index
    %c0_146 = arith.constant 0 : index
    %99 = vector.load %arg5[%c2_144, %c0_145, %c0_146] : memref<3x16x48xf32, #tpu.memory_space<vmem>>, vector<1x16x48xf32>
    %100 = vector.shape_cast %99 : vector<1x16x48xf32> to vector<16x48xf32>
    %c0_147 = arith.constant 0 : index
    %c0_148 = arith.constant 0 : index
    %101 = vector.load %arg10[%c0_147, %c0_148] : memref<48x360xf32, #tpu.memory_space<vmem>>, vector<48x320xf32>
    %cst_149 = arith.constant dense<0.000000e+00> : vector<16x320xf32>
    %102 = tpu.matmul %100, %101, %cst_149 {dimension_numbers = #tpu.dot_dimension_numbers<[1], [0], [0], [1], [0, 0, 1, 1], [], []>} : vector<16x48xf32>, vector<48x320xf32>, vector<16x320xf32> -> vector<16x320xf32>
    %c0_150 = arith.constant 0 : index
    %c0_151 = arith.constant 0 : index
    %c0_152 = arith.constant 0 : index
    %c0_153 = arith.constant 0 : index
    %103 = vector.load %arg8[%c0_150, %c0_151, %c0_152, %c0_153] : memref<1x1x16x320xf32, #tpu.memory_space<vmem>>, vector<1x1x16x320xf32>
    %104 = vector.shape_cast %103 : vector<1x1x16x320xf32> to vector<16x320xf32>
    %105 = arith.addf %104, %102 : vector<16x320xf32>
    %c0_154 = arith.constant 0 : index
    %c0_155 = arith.constant 0 : index
    %c0_156 = arith.constant 0 : index
    %c0_157 = arith.constant 0 : index
    %106 = vector.load %arg8[%c0_154, %c0_155, %c0_156, %c0_157] : memref<1x1x16x320xf32, #tpu.memory_space<vmem>>, vector<1x1x16x320xf32>
    %107 = vector.shape_cast %106 : vector<1x1x16x320xf32> to vector<16x320xf32>
    %108 = vector.shape_cast %105 : vector<16x320xf32> to vector<1x1x16x320xf32>
    tpu.vector_store %arg8[%c0_154, %c0_155, %c0_156, %c0_157], %108 {strides = array<i32>} : memref<1x1x16x320xf32, #tpu.memory_space<vmem>>, vector<1x1x16x320xf32>,
    %c0_158 = arith.constant 0 : index
    %c0_159 = arith.constant 0 : index
    %c0_160 = arith.constant 0 : index
    %c0_161 = arith.constant 0 : index
    %109 = vector.load %arg8[%c0_158, %c0_159, %c0_160, %c0_161] : memref<1x1x16x320xf32, #tpu.memory_space<vmem>>, vector<1x1x16x320xf32>
    %110 = vector.shape_cast %109 : vector<1x1x16x320xf32> to vector<16x320xf32>
    %c0_162 = arith.constant 0 : index
    %c0_163 = arith.constant 0 : index
    %111 = vector.load %arg6[%c0_162, %c0_163] : memref<16x1xf32, #tpu.memory_space<vmem>>, vector<16x1xf32>
    %112 = vector.broadcast %111 : vector<16x1xf32> to vector<16x320xf32>
    %113 = arith.addf %110, %112 : vector<16x320xf32>
    %c0_164 = arith.constant 0 : index
    %c0_165 = arith.constant 0 : index
    %c0_166 = arith.constant 0 : index
    %c42_167 = arith.constant 42 : index
    %114 = vector.load %arg2[%c0_164, %c0_165, %c0_166, %c42_167] : memref<1x1x16x528xf32, #tpu.memory_space<vmem>>, vector<1x1x16x320xf32>
    %115 = vector.shape_cast %114 : vector<1x1x16x320xf32> to vector<16x320xf32>
    %116 = arith.addf %113, %115 : vector<16x320xf32>
    %c0_168 = arith.constant 0 : index
    %c0_169 = arith.constant 0 : index
    %c0_170 = arith.constant 0 : index
    %c0_171 = arith.constant 0 : index
    %117 = vector.load %arg8[%c0_168, %c0_169, %c0_170, %c0_171] : memref<1x1x16x320xf32, #tpu.memory_space<vmem>>, vector<1x1x16x320xf32>
    %118 = vector.shape_cast %117 : vector<1x1x16x320xf32> to vector<16x320xf32>
    %119 = vector.shape_cast %116 : vector<16x320xf32> to vector<1x1x16x320xf32>
    tpu.vector_store %arg8[%c0_168, %c0_169, %c0_170, %c0_171], %119 {strides = array<i32>} : memref<1x1x16x320xf32, #tpu.memory_space<vmem>>, vector<1x1x16x320xf32>,
    return
  }
  func.func @transform_0(%arg0: i32, %arg1: i32) -> (i32, i32, i32, i32) {
    %c0_i32 = arith.constant 0 : i32
    %c0_i32_0 = arith.constant 0 : i32
    %c0_i32_1 = arith.constant 0 : i32
    return %arg0, %arg1, %c0_i32, %c0_i32_0 : i32, i32, i32, i32
  }
  func.func @transform_1(%arg0: i32, %arg1: i32) -> (i32, i32, i32) {
    %c0_i32 = arith.constant 0 : i32
    %c0_i32_0 = arith.constant 0 : i32
    %c0_i32_1 = arith.constant 0 : i32
    %c0_i32_2 = arith.constant 0 : i32
    return %c0_i32, %c0_i32_0, %c0_i32_1 : i32, i32, i32
  }
  func.func @transform_2(%arg0: i32, %arg1: i32) -> (i32, i32) {
    %c0_i32 = arith.constant 0 : i32
    %c0_i32_0 = arith.constant 0 : i32
    %c0_i32_1 = arith.constant 0 : i32
    return %c0_i32, %c0_i32_0 : i32, i32
  }
  func.func @transform_3(%arg0: i32, %arg1: i32) -> (i32, i32, i32) {
    %c0_i32 = arith.constant 0 : i32
    %c0_i32_0 = arith.constant 0 : i32
    %c0_i32_1 = arith.constant 0 : i32
    %c0_i32_2 = arith.constant 0 : i32
    return %c0_i32, %c0_i32_0, %c0_i32_1 : i32, i32, i32
  }
  func.func @transform_4(%arg0: i32, %arg1: i32) -> (i32, i32) {
    %c0_i32 = arith.constant 0 : i32
    %c0_i32_0 = arith.constant 0 : i32
    %c0_i32_1 = arith.constant 0 : i32
    return %c0_i32, %c0_i32_0 : i32, i32
  }
  func.func @transform_5(%arg0: i32, %arg1: i32) -> (i32, i32) {
    %c0_i32 = arith.constant 0 : i32
    %c0_i32_0 = arith.constant 0 : i32
    %c0_i32_1 = arith.constant 0 : i32
    return %c0_i32, %c0_i32_0 : i32, i32
  }
  func.func @transform_6(%arg0: i32, %arg1: i32) -> (i32, i32, i32, i32) {
    %c0_i32 = arith.constant 0 : i32
    %c0_i32_0 = arith.constant 0 : i32
    %c0_i32_1 = arith.constant 0 : i32
    return %arg0, %arg1, %c0_i32, %c0_i32_0 : i32, i32, i32, i32
  }
}

</mosaic_0001>

<llo_original>
// kernel: tile.8
$region0: #{tile.8}
  #allocation0 [shape = 's32[1]{0}', space=sflag, size = 0x4, scoped, tag = 'scoped memory for tile.8']
  %s0 = inlined_call_operand.vmem [shape: f32[20], index: 0, kind: input, shape index: {}]
  %s1 = inlined_call_operand.vmem [shape: f32[18,20], index: 1, kind: output, shape index: {}]
  // Predicated region
  $region2: #{tile.8} parent=0 // pred_check
    _
  $region3: #{tile.8} parent=0 // pred_check_branch
    %3 = sbr.rel (0) target = $region5
  $region4: #{tile.8} parent=0 // pred_region
    _
  $region5: #{tile.8} parent=0 // pred_fallthru
    _
  %v4 = vld [vmem:[%s0] ss:$0 sm:$0xff]
  %5 = vst [vmem:[%s1] sm:$0xff] %v4
  %s6 = scalar_lea.vmem %s1, 8
  %7 = vst [vmem:[%s6] sm:$0xff] %v4
  %s8 = scalar_lea.vmem %s1, 16
  %9 = vst [vmem:[%s8] sm:$0xff] %v4

// kernel: tile.9
$region0: #{tile.9}
  %s0 = inlined_call_operand.vmem [shape: f32[18,20], index: 0, kind: input, shape index: {}]
  %s1 = inlined_call_operand.vmem [shape: f32[1,360], index: 1, kind: output, shape index: {}]
  $region1: #{tile.9} parent=0
    #allocation0 [shape = 'u8[12288]{0}', space=vmem, size = 0x3000, scoped, tag = 'scoped mem for output reshape']
    %v2 = vld [vmem:[%s0] sm:$0x1]
    %vm3 = vcmask 162816
    %4 = vst.msk [vmem:[#allocation0] sm:$0x1] %vm3, %v2
    %s5 = scalar_lea.vmem %s0, 6
    %v6 = vld [vmem:[%s5] sm:$0x1]
    %s7 = scalar_lea.vmem %s0, 6
    %v8 = vld [vmem:[%s7] sm:$0x1]
    %vm9 = vcmask 64512
    %v10 = vsel %vm9, %v8, %v6
    %11 = vrot.lane.b32.xlu0 %v10, 120
    %v12 = vpop.permute.xlu0 %11
    %vm13 = vcmask 97280
    %s14 = scalar_lea.vmem [#allocation0], 8
    %15 = vst.msk [vmem:[%s14] sm:$0x1] %vm13, %v12
    %vm16 = vcmask 1048512
    %17 = vst.msk [vmem:[#allocation0] sm:$0x1] %vm16, %v12
    %s18 = scalar_lea.vmem %s0, 12
    %v19 = vld [vmem:[%s18] sm:$0x1]
    %s20 = scalar_lea.vmem %s0, 12
    %v21 = vld [vmem:[%s20] sm:$0x1]
    %vm22 = vcmask 130048
    %v23 = vsel %vm22, %v21, %v19
    %24 = vrot.lane.b32.xlu0 %v23, 112
    %v25 = vpop.permute.xlu0 %24
    %vm26 = vcmask 31744
    %s27 = scalar_lea.vmem [#allocation0], 16
    %28 = vst.msk [vmem:[%s27] sm:$0x1] %vm26, %v25
    %vm29 = vcmask 1048448
    %s30 = scalar_lea.vmem [#allocation0], 8
    %31 = vst.msk [vmem:[%s30] sm:$0x1] %vm29, %v25
    %s32 = scalar_lea.vmem %s0, 5
    %v33 = vld [vmem:[%s32] sm:$0x1]
    %34 = vrot.lane.b32.xlu0 %v33, 100
    %v35 = vpop.permute.xlu0 %34
    %vm36 = vcmask 982816
    %37 = vst.msk [vmem:[#allocation0] sm:$0x1] %vm36, %v35
    %s38 = scalar_lea.vmem %s0, 11
    %v39 = vld [vmem:[%s38] sm:$0x1]
    %40 = vrot.lane.b32.xlu0 %v39, 92
    %v41 = vpop.permute.xlu0 %40
    %vm42 = vcmask 917216
    %s43 = scalar_lea.vmem [#allocation0], 8
    %44 = vst.msk [vmem:[%s43] sm:$0x1] %vm42, %v41
    %s45 = scalar_lea.vmem %s0, 17
    %v46 = vld [vmem:[%s45] sm:$0x1]
    %47 = vrot.lane.b32.xlu0 %v46, 84
    %v48 = vpop.permute.xlu0 %47
    %vm49 = vcmask 851616
    %s50 = scalar_lea.vmem [#allocation0], 16
    %51 = vst.msk [vmem:[%s50] sm:$0x1] %vm49, %v48
    %s52 = scalar_lea.vmem %s0, 4
    %v53 = vld [vmem:[%s52] sm:$0x1]
    %54 = vrot.lane.b32.xlu0 %v53, 80
    %v55 = vpop.permute.xlu0 %54
    %vm56 = vcmask 818816
    %57 = vst.msk [vmem:[#allocation0] sm:$0x1] %vm56, %v55
    %s58 = scalar_lea.vmem %s0, 10
    %v59 = vld [vmem:[%s58] sm:$0x1]
    %60 = vrot.lane.b32.xlu0 %v59, 72
    %v61 = vpop.permute.xlu0 %60
    %vm62 = vcmask 753216
    %s63 = scalar_lea.vmem [#allocation0], 8
    %64 = vst.msk [vmem:[%s63] sm:$0x1] %vm62, %v61
    %s65 = scalar_lea.vmem %s0, 16
    %v66 = vld [vmem:[%s65] sm:$0x1]
    %67 = vrot.lane.b32.xlu0 %v66, 64
    %v68 = vpop.permute.xlu0 %67
    %vm69 = vcmask 687616
    %s70 = scalar_lea.vmem [#allocation0], 16
    %71 = vst.msk [vmem:[%s70] sm:$0x1] %vm69, %v68
    %s72 = scalar_lea.vmem %s0, 3
    %v73 = vld [vmem:[%s72] sm:$0x1]
    %74 = vrot.lane.b32.xlu0 %v73, 60
    %v75 = vpop.permute.xlu0 %74
    %vm76 = vcmask 654816
    %77 = vst.msk [vmem:[#allocation0] sm:$0x1] %vm76, %v75
    %s78 = scalar_lea.vmem %s0, 9
    %v79 = vld [vmem:[%s78] sm:$0x1]
    %80 = vrot.lane.b32.xlu0 %v79, 52
    %v81 = vpop.permute.xlu0 %80
    %vm82 = vcmask 589216
    %s83 = scalar_lea.vmem [#allocation0], 8
    %84 = vst.msk [vmem:[%s83] sm:$0x1] %vm82, %v81
    %s85 = scalar_lea.vmem %s0, 15
    %v86 = vld [vmem:[%s85] sm:$0x1]
    %87 = vrot.lane.b32.xlu0 %v86, 44
    %v88 = vpop.permute.xlu0 %87
    %vm89 = vcmask 523616
    %s90 = scalar_lea.vmem [#allocation0], 16
    %91 = vst.msk [vmem:[%s90] sm:$0x1] %vm89, %v88
    %s92 = scalar_lea.vmem %s0, 2
    %v93 = vld [vmem:[%s92] sm:$0x1]
    %94 = vrot.lane.b32.xlu0 %v93, 40
    %v95 = vpop.permute.xlu0 %94
    %vm96 = vcmask 490816
    %97 = vst.msk [vmem:[#allocation0] sm:$0x1] %vm96, %v95
    %s98 = scalar_lea.vmem %s0, 8
    %v99 = vld [vmem:[%s98] sm:$0x1]
    %100 = vrot.lane.b32.xlu0 %v99, 32
    %v101 = vpop.permute.xlu0 %100
    %vm102 = vcmask 425216
    %s103 = scalar_lea.vmem [#allocation0], 8
    %104 = vst.msk [vmem:[%s103] sm:$0x1] %vm102, %v101
    %s105 = scalar_lea.vmem %s0, 14
    %v106 = vld [vmem:[%s105] sm:$0x1]
    %107 = vrot.lane.b32.xlu0 %v106, 24
    %v108 = vpop.permute.xlu0 %107
    %vm109 = vcmask 359616
    %s110 = scalar_lea.vmem [#allocation0], 16
    %111 = vst.msk [vmem:[%s110] sm:$0x1] %vm109, %v108
    %s112 = scalar_lea.vmem %s0, 1
    %v113 = vld [vmem:[%s112] sm:$0x1]
    %114 = vrot.lane.b32.xlu0 %v113, 20
    %v115 = vpop.permute.xlu0 %114
    %vm116 = vcmask 326816
    %117 = vst.msk [vmem:[#allocation0] sm:$0x1] %vm116, %v115
    %s118 = scalar_lea.vmem %s0, 7
    %v119 = vld [vmem:[%s118] sm:$0x1]
    %120 = vrot.lane.b32.xlu0 %v119, 12
    %v121 = vpop.permute.xlu0 %120
    %vm122 = vcmask 261216
    %s123 = scalar_lea.vmem [#allocation0], 8
    %124 = vst.msk [vmem:[%s123] sm:$0x1] %vm122, %v121
    %s125 = scalar_lea.vmem %s0, 13
    %v126 = vld [vmem:[%s125] sm:$0x1]
    %127 = vrot.lane.b32.xlu0 %v126, 4
    %v128 = vpop.permute.xlu0 %127
    %vm129 = vcmask 195616
    %s130 = scalar_lea.vmem [#allocation0], 16
    %131 = vst.msk [vmem:[%s130] sm:$0x1] %vm129, %v128
    %s133 = sshllo.u32 0, 1
    %v135 = vld [vmem:[#allocation0] sm:%s133]
    %s136 = sshllo.u32 0, 1
    %137 = vst [vmem:[%s1] sm:%s136] %v135
    %s138 = scalar_lea.vmem [#allocation0], 8
    %v139 = vld [vmem:[%s138] sm:%s133]
    %s140 = sshllo.u32 0, 1
    %s141 = scalar_lea.vmem %s1, 1
    %142 = vst [vmem:[%s141] sm:%s140] %v139
    %s143 = scalar_lea.vmem [#allocation0], 16
    %v144 = vld [vmem:[%s143] sm:%s133]
    %s145 = sshllo.u32 0, 1
    %s146 = smul.addr 1, 2
    %s147 = scalar_lea.vmem %s1, %s146
    %148 = vst [vmem:[%s147] sm:%s145] %v144

// kernel: residual_block_nobn.1
$region0: #{residual_block_nobn.1}
  #allocation0 [shape = 'u32[]', space=smem, size = 0x4, offset = 0x4, fixed_abs, tag = 'smem constant byte address 0x4 - core index']
  #allocation1 [shape = 'u32[144,128]{1,0:T(1,128)}', space=vmem, size = 0x12000, scoped, tag = 'internal scratch']
  #allocation2 [shape = 'f32[16,488]{1,0:T(8,128)}', space=vmem, size = 0x8000, scoped, tag = 'scratch operand']
  #allocation3 [shape = 'f32[48,360]{1,0:T(8,128)}', space=vmem, size = 0x12000, scoped, tag = 'scratch operand']
  %s0 = inlined_call_operand.vmem [shape: f32[2,1,16,528], index: 0, kind: input, shape index: {}]
  %s1 = inlined_call_operand.vmem [shape: f32[3,16,48], index: 1, kind: input, shape index: {}]
  %s2 = inlined_call_operand.vmem [shape: f32[16,1], index: 2, kind: input, shape index: {}]
  %s3 = inlined_call_operand.vmem [shape: f32[3,16,48], index: 3, kind: input, shape index: {}]
  %s4 = inlined_call_operand.vmem [shape: f32[16,1], index: 4, kind: input, shape index: {}]
  %s5 = inlined_call_operand.vmem [shape: f32[1,360], index: 5, kind: input, shape index: {}]
  %s6 = inlined_call_operand.vmem [shape: f32[2,1,16,320], index: 6, kind: output, shape index: {}]
  %s7 = sld [smem:[#allocation0]]
  $region61: #{residual_block_nobn.1} parent=0
    _
  %s9 = ssub.s32 1, %s7
  %s10 = scalar_select 0, %s9, %s7
  loop: start=0, step=1, limit=4
  $region2: #{residual_block_nobn.1} parent=0 // loop_pre_header
    _
  $region3: #{residual_block_nobn.1} parent=0 // loop_header
    %s12 = sphi 0, %s16
    %p13 = scmp.ge.s32.totalorder %s12, 4
    %s19 = sphi 0, %s31
    %s20 = sphi 0, %s27
    %s21 = sphi 0, %s19
    %s22 = sphi 0, %s20
    %s23 = sphi 0, %s21
    %s24 = sphi 0, %s22
    %s36 = sphi 0, %s38
    %s39 = sphi 0, %s36
    %s40 = sphi 0, %s39
    %s56 = sphi 0, %s40
    %s60 = sphi 0, %s60
    %s62 = sphi 0, %s60
    %s63 = sphi 0, %s62
    %s77 = sphi 0, %s63
    %s81 = sphi 0, %s81
    %s83 = sphi 0, %s81
    %s84 = sphi 0, %s83
    %s98 = sphi 0, %s84
    %s102 = sphi 0, %s102
    %s104 = sphi 0, %s102
    %s105 = sphi 0, %s104
    %s119 = sphi 0, %s105
    %s123 = sphi 0, %s123
    %s125 = sphi 0, %s123
    %s126 = sphi 0, %s125
    %s140 = sphi 0, %s126
    %s144 = sphi 0, %s144
    %s146 = sphi 0, %s144
    %s147 = sphi 0, %s146
    %s161 = sphi 0, %s147
    %s169 = sphi 0, %s171
    %s172 = sphi 0, %s169
    %s173 = sphi 0, %s172
    %s189 = sphi 0, %s173
  $region4: #{residual_block_nobn.1} parent=0 // loop_header_branch
    %15 = sbr.rel (%p13) target = $region8
  $region5: #{residual_block_nobn.1} parent=0 // loop_body
    %s17 = ssub.s32 %s12, 1
    %s18 = ssub.s32 %s12, 2
    %s25 = sadd.s32 1, %s20
    %p26 = scmp.ge.s32.totalorder %s25, 1
    %s27 = scalar_select %p26, 0, %s25
    %s28 = sadd.s32 1, %s19
    %s29 = scalar_select %p26, %s28, %s19
    %p30 = scmp.ge.s32.totalorder %s29, 2
    %s31 = scalar_select %p30, 0, %s29
    %s32 = ssub.s32 %s19, %s31
    %s33 = ssub.s32 %s20, %s27
    %s34 = sor.u32 %s32, %s33
    %p35 = scmp.eq.s32.totalorder %s34, 0
    %s37 = sadd.s32 %s36, 1
    %s38 = scalar_select %p35, %s36, %s37
    %p41 = pneg %p35
    %p42 = scmp.eq.s32.totalorder %s12, 1
    %p43 = por %p41, %p42
    %p44 = scmp.ne.s32.totalorder %s36, %s39
    %p45 = scmp.eq.s32.totalorder %s12, 0
    %p46 = por %p44, %p45
    %p47 = scmp.ne.s32.totalorder %s36, %s39
    %p48 = scmp.eq.s32.totalorder %s17, 1
    %p49 = por %p47, %p48
    %p50 = scmp.ne.s32.totalorder %s39, %s40
    %p51 = scmp.eq.s32.totalorder %s17, 0
    %p52 = por %p50, %p51
    %p53 = scmp.ne.s32.totalorder %s39, %s40
    %p54 = scmp.eq.s32.totalorder %s18, 1
    %p55 = por %p53, %p54
    %p57 = scmp.ne.s32.totalorder %s40, %s56
    %p58 = scmp.eq.s32.totalorder %s18, 0
    %p59 = por %p57, %p58
    %s61 = sadd.s32 %s60, 1
    %p64 = scmp.eq.s32.totalorder %s12, 1
    %p65 = scmp.ne.s32.totalorder %s60, %s62
    %p66 = scmp.eq.s32.totalorder %s12, 0
    %p67 = por %p65, %p66
    %p68 = scmp.ne.s32.totalorder %s60, %s62
    %p69 = scmp.eq.s32.totalorder %s17, 1
    %p70 = por %p68, %p69
    %p71 = scmp.ne.s32.totalorder %s62, %s63
    %p72 = scmp.eq.s32.totalorder %s17, 0
    %p73 = por %p71, %p72
    %p74 = scmp.ne.s32.totalorder %s62, %s63
    %p75 = scmp.eq.s32.totalorder %s18, 1
    %p76 = por %p74, %p75
    %p78 = scmp.ne.s32.totalorder %s63, %s77
    %p79 = scmp.eq.s32.totalorder %s18, 0
    %p80 = por %p78, %p79
    %s82 = sadd.s32 %s81, 1
    %p85 = scmp.eq.s32.totalorder %s12, 1
    %p86 = scmp.ne.s32.totalorder %s81, %s83
    %p87 = scmp.eq.s32.totalorder %s12, 0
    %p88 = por %p86, %p87
    %p89 = scmp.ne.s32.totalorder %s81, %s83
    %p90 = scmp.eq.s32.totalorder %s17, 1
    %p91 = por %p89, %p90
    %p92 = scmp.ne.s32.totalorder %s83, %s84
    %p93 = scmp.eq.s32.totalorder %s17, 0
    %p94 = por %p92, %p93
    %p95 = scmp.ne.s32.totalorder %s83, %s84
    %p96 = scmp.eq.s32.totalorder %s18, 1
    %p97 = por %p95, %p96
    %p99 = scmp.ne.s32.totalorder %s84, %s98
    %p100 = scmp.eq.s32.totalorder %s18, 0
    %p101 = por %p99, %p100
    %s103 = sadd.s32 %s102, 1
    %p106 = scmp.eq.s32.totalorder %s12, 1
    %p107 = scmp.ne.s32.totalorder %s102, %s104
    %p108 = scmp.eq.s32.totalorder %s12, 0
    %p109 = por %p107, %p108
    %p110 = scmp.ne.s32.totalorder %s102, %s104
    %p111 = scmp.eq.s32.totalorder %s17, 1
    %p112 = por %p110, %p111
    %p113 = scmp.ne.s32.totalorder %s104, %s105
    %p114 = scmp.eq.s32.totalorder %s17, 0
    %p115 = por %p113, %p114
    %p116 = scmp.ne.s32.totalorder %s104, %s105
    %p117 = scmp.eq.s32.totalorder %s18, 1
    %p118 = por %p116, %p117
    %p120 = scmp.ne.s32.totalorder %s105, %s119
    %p121 = scmp.eq.s32.totalorder %s18, 0
    %p122 = por %p120, %p121
    %s124 = sadd.s32 %s123, 1
    %p127 = scmp.eq.s32.totalorder %s12, 1
    %p128 = scmp.ne.s32.totalorder %s123, %s125
    %p129 = scmp.eq.s32.totalorder %s12, 0
    %p130 = por %p128, %p129
    %p131 = scmp.ne.s32.totalorder %s123, %s125
    %p132 = scmp.eq.s32.totalorder %s17, 1
    %p133 = por %p131, %p132
    %p134 = scmp.ne.s32.totalorder %s125, %s126
    %p135 = scmp.eq.s32.totalorder %s17, 0
    %p136 = por %p134, %p135
    %p137 = scmp.ne.s32.totalorder %s125, %s126
    %p138 = scmp.eq.s32.totalorder %s18, 1
    %p139 = por %p137, %p138
    %p141 = scmp.ne.s32.totalorder %s126, %s140
    %p142 = scmp.eq.s32.totalorder %s18, 0
    %p143 = por %p141, %p142
    %s145 = sadd.s32 %s144, 1
    %p148 = scmp.eq.s32.totalorder %s12, 1
    %p149 = scmp.ne.s32.totalorder %s144, %s146
    %p150 = scmp.eq.s32.totalorder %s12, 0
    %p151 = por %p149, %p150
    %p152 = scmp.ne.s32.totalorder %s144, %s146
    %p153 = scmp.eq.s32.totalorder %s17, 1
    %p154 = por %p152, %p153
    %p155 = scmp.ne.s32.totalorder %s146, %s147
    %p156 = scmp.eq.s32.totalorder %s17, 0
    %p157 = por %p155, %p156
    %p158 = scmp.ne.s32.totalorder %s146, %s147
    %p159 = scmp.eq.s32.totalorder %s18, 1
    %p160 = por %p158, %p159
    %p162 = scmp.ne.s32.totalorder %s147, %s161
    %p163 = scmp.eq.s32.totalorder %s18, 0
    %p164 = por %p162, %p163
    %s165 = ssub.s32 %s19, %s31
    %s166 = ssub.s32 %s20, %s27
    %s167 = sor.u32 %s165, %s166
    %p168 = scmp.eq.s32.totalorder %s167, 0
    %s170 = sadd.s32 %s169, 1
    %s171 = scalar_select %p168, %s169, %s170
    %p174 = pneg %p168
    %p175 = scmp.eq.s32.totalorder %s12, 1
    %p176 = por %p174, %p175
    %p177 = scmp.ne.s32.totalorder %s169, %s172
    %p178 = scmp.eq.s32.totalorder %s12, 0
    %p179 = por %p177, %p178
    %p180 = scmp.ne.s32.totalorder %s169, %s172
    %p181 = scmp.eq.s32.totalorder %s17, 1
    %p182 = por %p180, %p181
    %p183 = scmp.ne.s32.totalorder %s172, %s173
    %p184 = scmp.eq.s32.totalorder %s17, 0
    %p185 = por %p183, %p184
    %p186 = scmp.ne.s32.totalorder %s172, %s173
    %p187 = scmp.eq.s32.totalorder %s18, 1
    %p188 = por %p186, %p187
    %p190 = scmp.ne.s32.totalorder %s173, %s189
    %p191 = scmp.eq.s32.totalorder %s18, 0
    %p192 = por %p190, %p191
    %p193 = scmp.le.s32.totalorder 1, %s12
    %p194 = scmp.lt.s32.totalorder %s12, 3
    %p195 = pnand %p193, %p194
    %p196 = pneg %p195
    // Predicated region
    $region9: #{residual_block_nobn.1} parent=5 // pred_check
      _
    $region10: #{residual_block_nobn.1} parent=5 // pred_check_branch
      %198 = sbr.rel (%p195) target = $region12
    $region11: #{residual_block_nobn.1} parent=5 // pred_region
      %s199 = ssub.s32 %s12, 1
      // Predicated region
      $region13: #{residual_block_nobn.1} parent=11 // pred_check
        %p200 = pneg %p73
      $region14: #{residual_block_nobn.1} parent=11 // pred_check_branch
        %202 = sbr.rel (%p200) target = $region16
      $region15: #{residual_block_nobn.1} parent=11 // pred_region
        _
      $region16: #{residual_block_nobn.1} parent=11 // pred_fallthru
        _
      // Predicated region
      $region17: #{residual_block_nobn.1} parent=11 // pred_check
        %p203 = pneg %p94
      $region18: #{residual_block_nobn.1} parent=11 // pred_check_branch
        %205 = sbr.rel (%p203) target = $region20
      $region19: #{residual_block_nobn.1} parent=11 // pred_region
        _
      $region20: #{residual_block_nobn.1} parent=11 // pred_fallthru
        _
      // Predicated region
      $region21: #{residual_block_nobn.1} parent=11 // pred_check
        %p206 = pneg %p115
      $region22: #{residual_block_nobn.1} parent=11 // pred_check_branch
        %208 = sbr.rel (%p206) target = $region24
      $region23: #{residual_block_nobn.1} parent=11 // pred_region
        _
      $region24: #{residual_block_nobn.1} parent=11 // pred_fallthru
        _
      // Predicated region
      $region25: #{residual_block_nobn.1} parent=11 // pred_check
        %p209 = pneg %p136
      $region26: #{residual_block_nobn.1} parent=11 // pred_check_branch
        %211 = sbr.rel (%p209) target = $region28
      $region27: #{residual_block_nobn.1} parent=11 // pred_region
        _
      $region28: #{residual_block_nobn.1} parent=11 // pred_fallthru
        _
      // Predicated region
      $region29: #{residual_block_nobn.1} parent=11 // pred_check
        %p212 = pneg %p157
      $region30: #{residual_block_nobn.1} parent=11 // pred_check_branch
        %214 = sbr.rel (%p212) target = $region32
      $region31: #{residual_block_nobn.1} parent=11 // pred_region
        _
      $region32: #{residual_block_nobn.1} parent=11 // pred_fallthru
        _
    $region12: #{residual_block_nobn.1} parent=5 // pred_fallthru
      _
    %p215 = scmp.lt.s32.totalorder %s12, 2
    // Predicated region
    $region33: #{residual_block_nobn.1} parent=5 // pred_check
      %p216 = pneg %p215
    $region34: #{residual_block_nobn.1} parent=5 // pred_check_branch
      %218 = sbr.rel (%p216) target = $region36
    $region35: #{residual_block_nobn.1} parent=5 // pred_region
      // Predicated region
      $region37: #{residual_block_nobn.1} parent=35 // pred_check
        %p219 = pneg %p46
      $region38: #{residual_block_nobn.1} parent=35 // pred_check_branch
        %221 = sbr.rel (%p219) target = $region40
      $region39: #{residual_block_nobn.1} parent=35 // pred_region
        %p222 = scmp.lt.s32.totalorder %s19, 1
        %s223 = scalar_select %p222, %s19, 1
        %p224 = scmp.lt.s32.totalorder %s20, 0
        %s225 = scalar_select %p224, %s20, 0
        %s226 = smul.addr %s225, 10
        %s227 = smul.addr %s223, 10
        %s228 = sadd.s32 %s226, %s227
        %s229 = smul.addr %s228, 8
        %s230 = scalar_lea.vmem %s0, %s229
      $region40: #{residual_block_nobn.1} parent=35 // pred_fallthru
        _
    $region36: #{residual_block_nobn.1} parent=5 // pred_fallthru
      _
    %p231 = scmp.le.s32.totalorder 1, %s12
    %p232 = scmp.lt.s32.totalorder %s12, 3
    %p233 = pnand %p231, %p232
    %p234 = pneg %p233
    // Predicated region
    $region41: #{residual_block_nobn.1} parent=5 // pred_check
      _
    $region42: #{residual_block_nobn.1} parent=5 // pred_check_branch
      %236 = sbr.rel (%p233) target = $region44
    $region43: #{residual_block_nobn.1} parent=5 // pred_region
      %s237 = ssub.s32 %s12, 1
      %p238 = scmp.lt.s32.totalorder %s21, 1
      %s239 = scalar_select %p238, %s21, 1
      %p240 = scmp.lt.s32.totalorder %s22, 0
      %s241 = scalar_select %p240, %s22, 0
      %s242 = smul.addr %s241, 10
      %s243 = smul.addr %s239, 10
      %s244 = sadd.s32 %s242, %s243
      %s245 = smul.addr %s244, 8
      %s246 = scalar_lea.vmem %s0, %s245
      %p247 = pneg %p52
      %p248 = pneg %p49
      %p249 = pneg %p73
      %p250 = pneg %p70
      %p251 = pneg %p94
      %p252 = pneg %p91
      %p253 = pneg %p115
      %p254 = pneg %p112
      %p255 = pneg %p136
      %p256 = pneg %p133
      %p257 = pneg %p157
      %p258 = pneg %p154
      %p259 = pneg %p185
      %p260 = pneg %p182
      %p261 = scmp.lt.s32.totalorder %s21, 1
      %s262 = scalar_select %p261, %s21, 1
      %p263 = scmp.lt.s32.totalorder %s22, 0
      %s264 = scalar_select %p263, %s22, 0
      %s265 = smul.addr %s264, 6
      %s266 = smul.addr %s262, 6
      %s267 = sadd.s32 %s265, %s266
      %s268 = smul.addr %s267, 8
      %s269 = scalar_lea.vmem %s6, %s268
      %p270 = scmp.lt.s32.totalorder %s21, 1
      %s271 = scalar_select %p270, %s21, 1
      %p272 = scmp.lt.s32.totalorder %s22, 0
      %s273 = scalar_select %p272, %s22, 0
      %s274 = smul.addr %s273, 10
      %s275 = smul.addr %s271, 10
      %s276 = sadd.s32 %s274, %s275
      %s277 = smul.addr %s276, 8
      %s278 = scalar_lea.vmem %s0, %s277
      %p279 = scmp.lt.s32.totalorder %s21, 1
      %s280 = scalar_select %p279, %s21, 1
      %p281 = scmp.lt.s32.totalorder %s22, 0
      %s282 = scalar_select %p281, %s22, 0
      %s283 = smul.addr %s282, 6
      %s284 = smul.addr %s280, 6
      %s285 = sadd.s32 %s283, %s284
      %s286 = smul.addr %s285, 8
      %s287 = scalar_lea.vmem %s6, %s286
      %vm288 = vcmask 1048384
      %289 = vst.msk [vmem:[#allocation2 + $0x10] sm:$0xff] %vm288, 0.0
      %vm290 = vcmask 850944
      %291 = vst.msk [vmem:[#allocation2 + $0x18] sm:$0xff] %vm290, 0.0
      %292 = vst.msk [vmem:[#allocation2 + $0x30] sm:$0xff] %vm288, 0.0
      %293 = vst.msk [vmem:[#allocation2 + $0x38] sm:$0xff] %vm290, 0.0
      %v294 = vld [vmem:[%s278] sm:$0xff]
      %v295 = vld [vmem:[%s278 + $0x8] sm:$0xff]
      %v296 = vld [vmem:[%s278 + $0x10] sm:$0xff]
      %v297 = vld [vmem:[%s278 + $0x28] sm:$0xff]
      %v298 = vld [vmem:[%s278 + $0x30] sm:$0xff]
      %v299 = vld [vmem:[%s278 + $0x38] sm:$0xff]
      %300 = vst [vmem:[#allocation3] sm:$0xff] %v294
      %301 = vst [vmem:[#allocation3 + $0x8] sm:$0xff] %v295
      %302 = vst.msk [vmem:[#allocation3 + $0x10] sm:$0xff] %vm290, %v296
      %303 = vst [vmem:[#allocation3 + $0x18] sm:$0xff] %v297
      %304 = vst [vmem:[#allocation3 + $0x20] sm:$0xff] %v298
      %305 = vst.msk [vmem:[#allocation3 + $0x28] sm:$0xff] %vm290, %v299
      %v306 = vld [vmem:[%s278] sm:$0xff]
      %v307 = vld [vmem:[%s278 + $0x8] sm:$0xff]
      %v308 = vld [vmem:[%s278 + $0x10] sm:$0xff]
      %v309 = vld [vmem:[%s278 + $0x28] sm:$0xff]
      %v310 = vld [vmem:[%s278 + $0x30] sm:$0xff]
      %v311 = vld [vmem:[%s278 + $0x38] sm:$0xff]
      %318 = vrot.lane.b32.xlu0 %v306, 127
      %v319 = vpop.permute.xlu0 %318
      %320 = vrot.lane.b32.xlu0 %v307, 127
      %v321 = vpop.permute.xlu0 %320
      %322 = vrot.lane.b32.xlu0 %v308, 127
      %v323 = vpop.permute.xlu0 %322
      %324 = vrot.lane.b32.xlu0 %v309, 127
      %v325 = vpop.permute.xlu0 %324
      %326 = vrot.lane.b32.xlu0 %v310, 127
      %v327 = vpop.permute.xlu0 %326
      %328 = vrot.lane.b32.xlu0 %v311, 127
      %v329 = vpop.permute.xlu0 %328
      %vm330 = vcmask 1039360
      %v331 = vsel %vm330, %v319, %v321
      %v332 = vsel %vm330, %v321, %v323
      %v333 = vsel %vm330, %v325, %v327
      %v334 = vsel %vm330, %v327, %v329
      %341 = vst [vmem:[#allocation3 + $0x30] sm:$0xff] %v331
      %342 = vst [vmem:[#allocation3 + $0x38] sm:$0xff] %v332
      %343 = vst.msk [vmem:[#allocation3 + $0x40] sm:$0xff] %vm290, %v323
      %344 = vst [vmem:[#allocation3 + $0x48] sm:$0xff] %v333
      %345 = vst [vmem:[#allocation3 + $0x50] sm:$0xff] %v334
      %346 = vst.msk [vmem:[#allocation3 + $0x58] sm:$0xff] %vm290, %v329
      %v347 = vld [vmem:[%s278] sm:$0xff]
      %v348 = vld [vmem:[%s278 + $0x8] sm:$0xff]
      %v349 = vld [vmem:[%s278 + $0x10] sm:$0xff]
      %v350 = vld [vmem:[%s278 + $0x28] sm:$0xff]
      %v351 = vld [vmem:[%s278 + $0x30] sm:$0xff]
      %v352 = vld [vmem:[%s278 + $0x38] sm:$0xff]
      %359 = vrot.lane.b32.xlu0 %v347, 126
      %v360 = vpop.permute.xlu0 %359
      %361 = vrot.lane.b32.xlu0 %v348, 126
      %v362 = vpop.permute.xlu0 %361
      %363 = vrot.lane.b32.xlu0 %v349, 126
      %v364 = vpop.permute.xlu0 %363
      %365 = vrot.lane.b32.xlu0 %v350, 126
      %v366 = vpop.permute.xlu0 %365
      %367 = vrot.lane.b32.xlu0 %v351, 126
      %v368 = vpop.permute.xlu0 %367
      %369 = vrot.lane.b32.xlu0 %v352, 126
      %v370 = vpop.permute.xlu0 %369
      %vm371 = vcmask 1031168
      %v372 = vsel %vm371, %v360, %v362
      %v373 = vsel %vm371, %v362, %v364
      %v374 = vsel %vm371, %v366, %v368
      %v375 = vsel %vm371, %v368, %v370
      %382 = vst [vmem:[#allocation3 + $0x60] sm:$0xff] %v372
      %383 = vst [vmem:[#allocation3 + $0x68] sm:$0xff] %v373
      %384 = vst.msk [vmem:[#allocation3 + $0x70] sm:$0xff] %vm290, %v364
      %385 = vst [vmem:[#allocation3 + $0x78] sm:$0xff] %v374
      %386 = vst [vmem:[#allocation3 + $0x80] sm:$0xff] %v375
      %387 = vst.msk [vmem:[#allocation3 + $0x88] sm:$0xff] %vm290, %v370
      %v388 = vld [vmem:[%s1] sm:$0xff]
      %v389 = vld [vmem:[%s1 + $0x8] sm:$0xff]
      %v390 = vld [vmem:[#allocation3] sm:$0xff]
      %v391 = vld [vmem:[#allocation3 + $0x8] sm:$0xff]
      %v392 = vld [vmem:[#allocation3 + $0x10] sm:$0xff]
      %v393 = vld [vmem:[#allocation3 + $0x18] sm:$0xff]
      %v394 = vld [vmem:[#allocation3 + $0x20] sm:$0xff]
      %v395 = vld [vmem:[#allocation3 + $0x28] sm:$0xff]
      %v396 = vld [vmem:[#allocation3 + $0x30] sm:$0xff]
      %v397 = vld [vmem:[#allocation3 + $0x38] sm:$0xff]
      %v398 = vld [vmem:[#allocation3 + $0x40] sm:$0xff]
      %v399 = vld [vmem:[#allocation3 + $0x48] sm:$0xff]
      %v400 = vld [vmem:[#allocation3 + $0x50] sm:$0xff]
      %v401 = vld [vmem:[#allocation3 + $0x58] sm:$0xff]
      %v402 = vld [vmem:[#allocation3 + $0x60] sm:$0xff]
      %v403 = vld [vmem:[#allocation3 + $0x68] sm:$0xff]
      %v404 = vld [vmem:[#allocation3 + $0x70] sm:$0xff]
      %v405 = vld [vmem:[#allocation3 + $0x78] sm:$0xff]
      %v406 = vld [vmem:[#allocation3 + $0x80] sm:$0xff]
      %v407 = vld [vmem:[#allocation3 + $0x88] sm:$0xff]
      %vm408 = vcmask 392192
      %v410 = vsel %vm408, %v388, 0
      %v413 = vsel %vm408, %v389, 0
      %415 = vmatprep.subr.mxu0 %v391
      %416 = vmatpush1.msra.mxu0 %v390
      %417 = vmatprep.subr.mxu0 %v394
      %418 = vmatpush1.msra.mxu0 %v393
      %419 = vmatprep.subr.mxu0 %v397
      %420 = vmatpush1.msra.mxu0 %v396
      %421 = vmatprep.subr.mxu0 %v400
      %422 = vmatpush1.msra.mxu0 %v399
      %423 = vmatprep.subr.mxu0 %v403
      %424 = vmatpush1.msra.mxu0 %v402
      %425 = vmatprep.subr.mxu0 %v406
      %426 = vmatpush1.msra.mxu0 %v405
      %427 = vmatprep.subr.mxu0 0.0
      %428 = vmatpush1.msra.mxu0 0.0
      %429 = vmatprep.subr.mxu0 0.0
      %430 = vmatpush1.msra.mxu0 0.0
      %431 = vmatprep.subr.mxu0 0.0
      %432 = vmatpush1.msra.mxu0 0.0
      %433 = vmatprep.subr.mxu0 0.0
      %434 = vmatpush1.msra.mxu0 0.0
      %435 = vmatprep.subr.mxu0 0.0
      %436 = vmatpush1.msra.mxu0 0.0
      %437 = vmatprep.subr.mxu0 0.0
      %438 = vmatpush1.msra.mxu0 0.0
      %439 = vmatprep.subr.mxu0 0.0
      %440 = vmatpush1.msra.mxu0 0.0
      %441 = vmatprep.subr.mxu0 0.0
      %442 = vmatpush1.msra.mxu0 0.0
      %443 = vmatprep.subr.mxu0 0.0
      %444 = vmatpush1.msra.mxu0 0.0
      %445 = vmatprep.subr.mxu0 0.0
      %446 = vmatpush1.msra.mxu0 0.0
      %447 = vmatprep.subr.mxu0 0.0
      %448 = vmatpush1.msra.mxu0 0.0
      %449 = vmatprep.subr.mxu0 0.0
      %450 = vmatpush1.msra.mxu0 0.0
      %451 = vmatprep.subr.mxu0 0.0
      %452 = vmatpush1.msra.mxu0 0.0
      %453 = vmatprep.subr.mxu0 0.0
      %454 = vmatpush1.msra.mxu0 0.0
      %455 = vmatprep.subr.mxu0 0.0
      %456 = vmatpush1.msra.mxu0 0.0
      %457 = vmatprep.subr.mxu0 0.0
      %458 = vmatpush1.msra.mxu0 0.0
      %459 = vmatprep.subr.mxu0 0.0
      %460 = vmatpush1.msra.mxu0 0.0
      %461 = vmatprep.subr.mxu0 0.0
      %462 = vmatpush1.msra.mxu0 0.0
      %463 = vmatprep.subr.mxu0 0.0
      %464 = vmatpush1.msra.mxu0 0.0
      %465 = vmatprep.subr.mxu0 0.0
      %466 = vmatpush1.msra.mxu0 0.0
      %467 = vmatprep.subr.mxu0 0.0
      %468 = vmatpush1.msra.mxu0 0.0
      %469 = vmatprep.subr.mxu0 0.0
      %470 = vmatpush1.msra.mxu0 0.0
      %471 = vmatprep.subr.mxu0 0.0
      %472 = vmatpush1.msra.mxu0 0.0
      %473 = vmatprep.subr.mxu0 0.0
      %474 = vmatpush1.msra.mxu0 0.0
      %475 = vmatprep.subr.mxu0 0.0
      %476 = vmatpush1.msra.mxu0 0.0
      %477 = vmatprep.subr.mxu0 0.0
      %478 = vmatpush1.msra.mxu0 0.0
      %479 = vmatprep.mubr.f32.mxu0 0.0
      %480 = vmatmul.mubr.f32.gmra.mrb[0].mxu0 %v410
      %v481 = vpop.f32.mrb[0].mxu0
      %v482 = vadd.f32 0.0, %v481
      %v483 = vpop.f32.mrb[0].mxu0
      %v484 = vadd.f32 0.0, %v483
      %485 = vmatprep.mubr.f32.mxu0 0.0
      %486 = vmatmul.mubr.f32.gmra.mrb[0].mxu0 %v413
      %v487 = vpop.f32.mrb[0].mxu0
      %v488 = vadd.f32 0.0, %v487
      %v489 = vpop.f32.mrb[0].mxu0
      %v490 = vadd.f32 0.0, %v489
      %491 = vdwg.mxu0
      %492 = vmatprep.subr.mxu0 0.0
      %493 = vmatpush1.msra.mxu0 %v392
      %494 = vmatprep.subr.mxu0 0.0
      %495 = vmatpush1.msra.mxu0 %v395
      %496 = vmatprep.subr.mxu0 0.0
      %497 = vmatpush1.msra.mxu0 %v398
      %498 = vmatprep.subr.mxu0 0.0
      %499 = vmatpush1.msra.mxu0 %v401
      %500 = vmatprep.subr.mxu0 0.0
      %501 = vmatpush1.msra.mxu0 %v404
      %502 = vmatprep.subr.mxu0 0.0
      %503 = vmatpush1.msra.mxu0 %v407
      %504 = vmatprep.subr.mxu0 0.0
      %505 = vmatpush1.msra.mxu0 0.0
      %506 = vmatprep.subr.mxu0 0.0
      %507 = vmatpush1.msra.mxu0 0.0
      %508 = vmatprep.subr.mxu0 0.0
      %509 = vmatpush1.msra.mxu0 0.0
      %510 = vmatprep.subr.mxu0 0.0
      %511 = vmatpush1.msra.mxu0 0.0
      %512 = vmatprep.subr.mxu0 0.0
      %513 = vmatpush1.msra.mxu0 0.0
      %514 = vmatprep.subr.mxu0 0.0
      %515 = vmatpush1.msra.mxu0 0.0
      %516 = vmatprep.subr.mxu0 0.0
      %517 = vmatpush1.msra.mxu0 0.0
      %518 = vmatprep.subr.mxu0 0.0
      %519 = vmatpush1.msra.mxu0 0.0
      %520 = vmatprep.subr.mxu0 0.0
      %521 = vmatpush1.msra.mxu0 0.0
      %522 = vmatprep.subr.mxu0 0.0
      %523 = vmatpush1.msra.mxu0 0.0
      %524 = vmatprep.subr.mxu0 0.0
      %525 = vmatpush1.msra.mxu0 0.0
      %526 = vmatprep.subr.mxu0 0.0
      %527 = vmatpush1.msra.mxu0 0.0
      %528 = vmatprep.subr.mxu0 0.0
      %529 = vmatpush1.msra.mxu0 0.0
      %530 = vmatprep.subr.mxu0 0.0
      %531 = vmatpush1.msra.mxu0 0.0
      %532 = vmatprep.subr.mxu0 0.0
      %533 = vmatpush1.msra.mxu0 0.0
      %534 = vmatprep.subr.mxu0 0.0
      %535 = vmatpush1.msra.mxu0 0.0
      %536 = vmatprep.subr.mxu0 0.0
      %537 = vmatpush1.msra.mxu0 0.0
      %538 = vmatprep.subr.mxu0 0.0
      %539 = vmatpush1.msra.mxu0 0.0
      %540 = vmatprep.subr.mxu0 0.0
      %541 = vmatpush1.msra.mxu0 0.0
      %542 = vmatprep.subr.mxu0 0.0
      %543 = vmatpush1.msra.mxu0 0.0
      %544 = vmatprep.subr.mxu0 0.0
      %545 = vmatpush1.msra.mxu0 0.0
      %546 = vmatprep.subr.mxu0 0.0
      %547 = vmatpush1.msra.mxu0 0.0
      %548 = vmatprep.subr.mxu0 0.0
      %549 = vmatpush1.msra.mxu0 0.0
      %550 = vmatprep.subr.mxu0 0.0
      %551 = vmatpush1.msra.mxu0 0.0
      %552 = vmatprep.subr.mxu0 0.0
      %553 = vmatpush1.msra.mxu0 0.0
      %554 = vmatprep.subr.mxu0 0.0
      %555 = vmatpush1.msra.mxu0 0.0
      %556 = vmatprep.mubr.f32.mxu0 0.0
      %557 = vmatmul.mubr.f32.gmra.mrb[0].mxu0 %v410
      %v558 = vpop.f32.mrb[0].mxu0
      %v559 = vadd.f32 0.0, %v558
      %v560 = vpop.f32.mrb[0].mxu0
      %561 = vmatprep.mubr.f32.mxu0 0.0
      %562 = vmatmul.mubr.f32.gmra.mrb[0].mxu0 %v413
      %v563 = vpop.f32.mrb[0].mxu0
      %v564 = vadd.f32 0.0, %v563
      %v565 = vpop.f32.mrb[0].mxu0
      %566 = vdwg.mxu0
      %567 = vst [vmem:[#allocation2] sm:$0xff] %v482
      %568 = vst [vmem:[#allocation2 + $0x8] sm:$0xff] %v484
      %569 = vst.msk [vmem:[#allocation2 + $0x10] sm:$0xff] %vm290, %v559
      %570 = vst [vmem:[#allocation2 + $0x20] sm:$0xff] %v488
      %571 = vst [vmem:[#allocation2 + $0x28] sm:$0xff] %v490
      %572 = vst.msk [vmem:[#allocation2 + $0x30] sm:$0xff] %vm290, %v564
      %v573 = vld [vmem:[%s278] sm:$0xff]
      %v574 = vld [vmem:[%s278 + $0x8] sm:$0xff]
      %v575 = vld [vmem:[%s278 + $0x10] sm:$0xff]
      %v576 = vld [vmem:[%s278 + $0x28] sm:$0xff]
      %v577 = vld [vmem:[%s278 + $0x30] sm:$0xff]
      %v578 = vld [vmem:[%s278 + $0x38] sm:$0xff]
      %585 = vrot.lane.b32.xlu0 %v573, 108
      %v586 = vpop.permute.xlu0 %585
      %587 = vrot.lane.b32.xlu0 %v574, 108
      %v588 = vpop.permute.xlu0 %587
      %589 = vrot.lane.b32.xlu0 %v575, 108
      %v590 = vpop.permute.xlu0 %589
      %591 = vrot.lane.b32.xlu0 %v576, 108
      %v592 = vpop.permute.xlu0 %591
      %593 = vrot.lane.b32.xlu0 %v577, 108
      %v594 = vpop.permute.xlu0 %593
      %595 = vrot.lane.b32.xlu0 %v578, 108
      %v596 = vpop.permute.xlu0 %595
      %vm597 = vcmask 883712
      %v598 = vsel %vm597, %v586, %v588
      %v599 = vsel %vm597, %v588, %v590
      %v600 = vsel %vm597, %v592, %v594
      %v601 = vsel %vm597, %v594, %v596
      %608 = vst [vmem:[#allocation3] sm:$0xff] %v598
      %609 = vst [vmem:[#allocation3 + $0x8] sm:$0xff] %v599
      %610 = vst.msk [vmem:[#allocation3 + $0x10] sm:$0xff] %vm290, %v590
      %611 = vst [vmem:[#allocation3 + $0x18] sm:$0xff] %v600
      %612 = vst [vmem:[#allocation3 + $0x20] sm:$0xff] %v601
      %613 = vst.msk [vmem:[#allocation3 + $0x28] sm:$0xff] %vm290, %v596
      %v614 = vld [vmem:[%s278] sm:$0xff]
      %v615 = vld [vmem:[%s278 + $0x8] sm:$0xff]
      %v616 = vld [vmem:[%s278 + $0x10] sm:$0xff]
      %v617 = vld [vmem:[%s278 + $0x28] sm:$0xff]
      %v618 = vld [vmem:[%s278 + $0x30] sm:$0xff]
      %v619 = vld [vmem:[%s278 + $0x38] sm:$0xff]
      %626 = vrot.lane.b32.xlu0 %v614, 107
      %v627 = vpop.permute.xlu0 %626
      %628 = vrot.lane.b32.xlu0 %v615, 107
      %v629 = vpop.permute.xlu0 %628
      %630 = vrot.lane.b32.xlu0 %v616, 107
      %v631 = vpop.permute.xlu0 %630
      %632 = vrot.lane.b32.xlu0 %v617, 107
      %v633 = vpop.permute.xlu0 %632
      %634 = vrot.lane.b32.xlu0 %v618, 107
      %v635 = vpop.permute.xlu0 %634
      %636 = vrot.lane.b32.xlu0 %v619, 107
      %v637 = vpop.permute.xlu0 %636
      %vm638 = vcmask 875520
      %v639 = vsel %vm638, %v627, %v629
      %v640 = vsel %vm638, %v629, %v631
      %v641 = vsel %vm638, %v633, %v635
      %v642 = vsel %vm638, %v635, %v637
      %649 = vst [vmem:[#allocation3 + $0x30] sm:$0xff] %v639
      %650 = vst [vmem:[#allocation3 + $0x38] sm:$0xff] %v640
      %651 = vst.msk [vmem:[#allocation3 + $0x40] sm:$0xff] %vm290, %v631
      %652 = vst [vmem:[#allocation3 + $0x48] sm:$0xff] %v641
      %653 = vst [vmem:[#allocation3 + $0x50] sm:$0xff] %v642
      %654 = vst.msk [vmem:[#allocation3 + $0x58] sm:$0xff] %vm290, %v637
      %v655 = vld [vmem:[%s278] sm:$0xff]
      %v656 = vld [vmem:[%s278 + $0x8] sm:$0xff]
      %v657 = vld [vmem:[%s278 + $0x10] sm:$0xff]
      %v658 = vld [vmem:[%s278 + $0x28] sm:$0xff]
      %v659 = vld [vmem:[%s278 + $0x30] sm:$0xff]
      %v660 = vld [vmem:[%s278 + $0x38] sm:$0xff]
      %667 = vrot.lane.b32.xlu0 %v655, 106
      %v668 = vpop.permute.xlu0 %667
      %669 = vrot.lane.b32.xlu0 %v656, 106
      %v670 = vpop.permute.xlu0 %669
      %671 = vrot.lane.b32.xlu0 %v657, 106
      %v672 = vpop.permute.xlu0 %671
      %673 = vrot.lane.b32.xlu0 %v658, 106
      %v674 = vpop.permute.xlu0 %673
      %675 = vrot.lane.b32.xlu0 %v659, 106
      %v676 = vpop.permute.xlu0 %675
      %677 = vrot.lane.b32.xlu0 %v660, 106
      %v678 = vpop.permute.xlu0 %677
      %vm679 = vcmask 867328
      %v680 = vsel %vm679, %v668, %v670
      %v681 = vsel %vm679, %v670, %v672
      %v682 = vsel %vm679, %v674, %v676
      %v683 = vsel %vm679, %v676, %v678
      %690 = vst [vmem:[#allocation3 + $0x60] sm:$0xff] %v680
      %691 = vst [vmem:[#allocation3 + $0x68] sm:$0xff] %v681
      %692 = vst.msk [vmem:[#allocation3 + $0x70] sm:$0xff] %vm290, %v672
      %693 = vst [vmem:[#allocation3 + $0x78] sm:$0xff] %v682
      %694 = vst [vmem:[#allocation3 + $0x80] sm:$0xff] %v683
      %695 = vst.msk [vmem:[#allocation3 + $0x88] sm:$0xff] %vm290, %v678
      %s696 = scalar_lea.vmem %s1, 16
      %v697 = vld [vmem:[%s696] sm:$0xff]
      %v698 = vld [vmem:[%s696 + $0x8] sm:$0xff]
      %v699 = vld [vmem:[#allocation3] sm:$0xff]
      %v700 = vld [vmem:[#allocation3 + $0x8] sm:$0xff]
      %v701 = vld [vmem:[#allocation3 + $0x10] sm:$0xff]
      %v702 = vld [vmem:[#allocation3 + $0x18] sm:$0xff]
      %v703 = vld [vmem:[#allocation3 + $0x20] sm:$0xff]
      %v704 = vld [vmem:[#allocation3 + $0x28] sm:$0xff]
      %v705 = vld [vmem:[#allocation3 + $0x30] sm:$0xff]
      %v706 = vld [vmem:[#allocation3 + $0x38] sm:$0xff]
      %v707 = vld [vmem:[#allocation3 + $0x40] sm:$0xff]
      %v708 = vld [vmem:[#allocation3 + $0x48] sm:$0xff]
      %v709 = vld [vmem:[#allocation3 + $0x50] sm:$0xff]
      %v710 = vld [vmem:[#allocation3 + $0x58] sm:$0xff]
      %v711 = vld [vmem:[#allocation3 + $0x60] sm:$0xff]
      %v712 = vld [vmem:[#allocation3 + $0x68] sm:$0xff]
      %v713 = vld [vmem:[#allocation3 + $0x70] sm:$0xff]
      %v714 = vld [vmem:[#allocation3 + $0x78] sm:$0xff]
      %v715 = vld [vmem:[#allocation3 + $0x80] sm:$0xff]
      %v716 = vld [vmem:[#allocation3 + $0x88] sm:$0xff]
      %v718 = vsel %vm408, %v697, 0
      %v721 = vsel %vm408, %v698, 0
      %723 = vmatprep.subr.mxu0 %v700
      %724 = vmatpush1.msra.mxu0 %v699
      %725 = vmatprep.subr.mxu0 %v703
      %726 = vmatpush1.msra.mxu0 %v702
      %727 = vmatprep.subr.mxu0 %v706
      %728 = vmatpush1.msra.mxu0 %v705
      %729 = vmatprep.subr.mxu0 %v709
      %730 = vmatpush1.msra.mxu0 %v708
      %731 = vmatprep.subr.mxu0 %v712
      %732 = vmatpush1.msra.mxu0 %v711
      %733 = vmatprep.subr.mxu0 %v715
      %734 = vmatpush1.msra.mxu0 %v714
      %735 = vmatprep.subr.mxu0 0.0
      %736 = vmatpush1.msra.mxu0 0.0
      %737 = vmatprep.subr.mxu0 0.0
      %738 = vmatpush1.msra.mxu0 0.0
      %739 = vmatprep.subr.mxu0 0.0
      %740 = vmatpush1.msra.mxu0 0.0
      %741 = vmatprep.subr.mxu0 0.0
      %742 = vmatpush1.msra.mxu0 0.0
      %743 = vmatprep.subr.mxu0 0.0
      %744 = vmatpush1.msra.mxu0 0.0
      %745 = vmatprep.subr.mxu0 0.0
      %746 = vmatpush1.msra.mxu0 0.0
      %747 = vmatprep.subr.mxu0 0.0
      %748 = vmatpush1.msra.mxu0 0.0
      %749 = vmatprep.subr.mxu0 0.0
      %750 = vmatpush1.msra.mxu0 0.0
      %751 = vmatprep.subr.mxu0 0.0
      %752 = vmatpush1.msra.mxu0 0.0
      %753 = vmatprep.subr.mxu0 0.0
      %754 = vmatpush1.msra.mxu0 0.0
      %755 = vmatprep.subr.mxu0 0.0
      %756 = vmatpush1.msra.mxu0 0.0
      %757 = vmatprep.subr.mxu0 0.0
      %758 = vmatpush1.msra.mxu0 0.0
      %759 = vmatprep.subr.mxu0 0.0
      %760 = vmatpush1.msra.mxu0 0.0
      %761 = vmatprep.subr.mxu0 0.0
      %762 = vmatpush1.msra.mxu0 0.0
      %763 = vmatprep.subr.mxu0 0.0
      %764 = vmatpush1.msra.mxu0 0.0
      %765 = vmatprep.subr.mxu0 0.0
      %766 = vmatpush1.msra.mxu0 0.0
      %767 = vmatprep.subr.mxu0 0.0
      %768 = vmatpush1.msra.mxu0 0.0
      %769 = vmatprep.subr.mxu0 0.0
      %770 = vmatpush1.msra.mxu0 0.0
      %771 = vmatprep.subr.mxu0 0.0
      %772 = vmatpush1.msra.mxu0 0.0
      %773 = vmatprep.subr.mxu0 0.0
      %774 = vmatpush1.msra.mxu0 0.0
      %775 = vmatprep.subr.mxu0 0.0
      %776 = vmatpush1.msra.mxu0 0.0
      %777 = vmatprep.subr.mxu0 0.0
      %778 = vmatpush1.msra.mxu0 0.0
      %779 = vmatprep.subr.mxu0 0.0
      %780 = vmatpush1.msra.mxu0 0.0
      %781 = vmatprep.subr.mxu0 0.0
      %782 = vmatpush1.msra.mxu0 0.0
      %783 = vmatprep.subr.mxu0 0.0
      %784 = vmatpush1.msra.mxu0 0.0
      %785 = vmatprep.subr.mxu0 0.0
      %786 = vmatpush1.msra.mxu0 0.0
      %787 = vmatprep.mubr.f32.mxu0 0.0
      %788 = vmatmul.mubr.f32.gmra.mrb[0].mxu0 %v718
      %v789 = vpop.f32.mrb[0].mxu0
      %v790 = vadd.f32 0.0, %v789
      %v791 = vpop.f32.mrb[0].mxu0
      %v792 = vadd.f32 0.0, %v791
      %793 = vmatprep.mubr.f32.mxu0 0.0
      %794 = vmatmul.mubr.f32.gmra.mrb[0].mxu0 %v721
      %v795 = vpop.f32.mrb[0].mxu0
      %v796 = vadd.f32 0.0, %v795
      %v797 = vpop.f32.mrb[0].mxu0
      %v798 = vadd.f32 0.0, %v797
      %799 = vdwg.mxu0
      %800 = vmatprep.subr.mxu0 0.0
      %801 = vmatpush1.msra.mxu0 %v701
      %802 = vmatprep.subr.mxu0 0.0
      %803 = vmatpush1.msra.mxu0 %v704
      %804 = vmatprep.subr.mxu0 0.0
      %805 = vmatpush1.msra.mxu0 %v707
      %806 = vmatprep.subr.mxu0 0.0
      %807 = vmatpush1.msra.mxu0 %v710
      %808 = vmatprep.subr.mxu0 0.0
      %809 = vmatpush1.msra.mxu0 %v713
      %810 = vmatprep.subr.mxu0 0.0
      %811 = vmatpush1.msra.mxu0 %v716
      %812 = vmatprep.subr.mxu0 0.0
      %813 = vmatpush1.msra.mxu0 0.0
      %814 = vmatprep.subr.mxu0 0.0
      %815 = vmatpush1.msra.mxu0 0.0
      %816 = vmatprep.subr.mxu0 0.0
      %817 = vmatpush1.msra.mxu0 0.0
      %818 = vmatprep.subr.mxu0 0.0
      %819 = vmatpush1.msra.mxu0 0.0
      %820 = vmatprep.subr.mxu0 0.0
      %821 = vmatpush1.msra.mxu0 0.0
      %822 = vmatprep.subr.mxu0 0.0
      %823 = vmatpush1.msra.mxu0 0.0
      %824 = vmatprep.subr.mxu0 0.0
      %825 = vmatpush1.msra.mxu0 0.0
      %826 = vmatprep.subr.mxu0 0.0
      %827 = vmatpush1.msra.mxu0 0.0
      %828 = vmatprep.subr.mxu0 0.0
      %829 = vmatpush1.msra.mxu0 0.0
      %830 = vmatprep.subr.mxu0 0.0
      %831 = vmatpush1.msra.mxu0 0.0
      %832 = vmatprep.subr.mxu0 0.0
      %833 = vmatpush1.msra.mxu0 0.0
      %834 = vmatprep.subr.mxu0 0.0
      %835 = vmatpush1.msra.mxu0 0.0
      %836 = vmatprep.subr.mxu0 0.0
      %837 = vmatpush1.msra.mxu0 0.0
      %838 = vmatprep.subr.mxu0 0.0
      %839 = vmatpush1.msra.mxu0 0.0
      %840 = vmatprep.subr.mxu0 0.0
      %841 = vmatpush1.msra.mxu0 0.0
      %842 = vmatprep.subr.mxu0 0.0
      %843 = vmatpush1.msra.mxu0 0.0
      %844 = vmatprep.subr.mxu0 0.0
      %845 = vmatpush1.msra.mxu0 0.0
      %846 = vmatprep.subr.mxu0 0.0
      %847 = vmatpush1.msra.mxu0 0.0
      %848 = vmatprep.subr.mxu0 0.0
      %849 = vmatpush1.msra.mxu0 0.0
      %850 = vmatprep.subr.mxu0 0.0
      %851 = vmatpush1.msra.mxu0 0.0
      %852 = vmatprep.subr.mxu0 0.0
      %853 = vmatpush1.msra.mxu0 0.0
      %854 = vmatprep.subr.mxu0 0.0
      %855 = vmatpush1.msra.mxu0 0.0
      %856 = vmatprep.subr.mxu0 0.0
      %857 = vmatpush1.msra.mxu0 0.0
      %858 = vmatprep.subr.mxu0 0.0
      %859 = vmatpush1.msra.mxu0 0.0
      %860 = vmatprep.subr.mxu0 0.0
      %861 = vmatpush1.msra.mxu0 0.0
      %862 = vmatprep.subr.mxu0 0.0
      %863 = vmatpush1.msra.mxu0 0.0
      %864 = vmatprep.mubr.f32.mxu0 0.0
      %865 = vmatmul.mubr.f32.gmra.mrb[0].mxu0 %v718
      %v866 = vpop.f32.mrb[0].mxu0
      %v867 = vadd.f32 0.0, %v866
      %v868 = vpop.f32.mrb[0].mxu0
      %869 = vmatprep.mubr.f32.mxu0 0.0
      %870 = vmatmul.mubr.f32.gmra.mrb[0].mxu0 %v721
      %v871 = vpop.f32.mrb[0].mxu0
      %v872 = vadd.f32 0.0, %v871
      %v873 = vpop.f32.mrb[0].mxu0
      %874 = vdwg.mxu0
      %v875 = vld [vmem:[#allocation2] sm:$0xff]
      %v876 = vld [vmem:[#allocation2 + $0x8] sm:$0xff]
      %v877 = vld [vmem:[#allocation2 + $0x10] sm:$0xff]
      %v878 = vld [vmem:[#allocation2 + $0x20] sm:$0xff]
      %v879 = vld [vmem:[#allocation2 + $0x28] sm:$0xff]
      %v880 = vld [vmem:[#allocation2 + $0x30] sm:$0xff]
      %v881 = vadd.f32 %v875, %v790
      %v882 = vadd.f32 %v876, %v792
      %v883 = vadd.f32 %v877, %v867
      %v884 = vadd.f32 %v878, %v796
      %v885 = vadd.f32 %v879, %v798
      %v886 = vadd.f32 %v880, %v872
      %887 = vst [vmem:[#allocation2] sm:$0xff] %v881
      %888 = vst [vmem:[#allocation2 + $0x8] sm:$0xff] %v882
      %889 = vst.msk [vmem:[#allocation2 + $0x10] sm:$0xff] %vm290, %v883
      %890 = vst [vmem:[#allocation2 + $0x20] sm:$0xff] %v884
      %891 = vst [vmem:[#allocation2 + $0x28] sm:$0xff] %v885
      %892 = vst.msk [vmem:[#allocation2 + $0x30] sm:$0xff] %vm290, %v886
      %v893 = vld [vmem:[%s278] sm:$0xff]
      %v894 = vld [vmem:[%s278 + $0x8] sm:$0xff]
      %v895 = vld [vmem:[%s278 + $0x10] sm:$0xff]
      %v896 = vld [vmem:[%s278 + $0x18] sm:$0xff]
      %v897 = vld [vmem:[%s278 + $0x28] sm:$0xff]
      %v898 = vld [vmem:[%s278 + $0x30] sm:$0xff]
      %v899 = vld [vmem:[%s278 + $0x38] sm:$0xff]
      %v900 = vld [vmem:[%s278 + $0x40] sm:$0xff]
      %909 = vrot.lane.b32.xlu0 %v893, 88
      %v910 = vpop.permute.xlu0 %909
      %911 = vrot.lane.b32.xlu0 %v894, 88
      %v912 = vpop.permute.xlu0 %911
      %913 = vrot.lane.b32.xlu0 %v895, 88
      %v914 = vpop.permute.xlu0 %913
      %915 = vrot.lane.b32.xlu0 %v896, 88
      %v916 = vpop.permute.xlu0 %915
      %917 = vrot.lane.b32.xlu0 %v897, 88
      %v918 = vpop.permute.xlu0 %917
      %919 = vrot.lane.b32.xlu0 %v898, 88
      %v920 = vpop.permute.xlu0 %919
      %921 = vrot.lane.b32.xlu0 %v899, 88
      %v922 = vpop.permute.xlu0 %921
      %923 = vrot.lane.b32.xlu0 %v900, 88
      %v924 = vpop.permute.xlu0 %923
      %vm925 = vcmask 719872
      %v926 = vsel %vm925, %v910, %v912
      %v927 = vsel %vm925, %v912, %v914
      %v928 = vsel %vm925, %v914, %v916
      %v929 = vsel %vm925, %v918, %v920
      %v930 = vsel %vm925, %v920, %v922
      %v931 = vsel %vm925, %v922, %v924
      %938 = vst [vmem:[#allocation3] sm:$0xff] %v926
      %939 = vst [vmem:[#allocation3 + $0x8] sm:$0xff] %v927
      %940 = vst.msk [vmem:[#allocation3 + $0x10] sm:$0xff] %vm290, %v928
      %941 = vst [vmem:[#allocation3 + $0x18] sm:$0xff] %v929
      %942 = vst [vmem:[#allocation3 + $0x20] sm:$0xff] %v930
      %943 = vst.msk [vmem:[#allocation3 + $0x28] sm:$0xff] %vm290, %v931
      %v944 = vld [vmem:[%s278] sm:$0xff]
      %v945 = vld [vmem:[%s278 + $0x8] sm:$0xff]
      %v946 = vld [vmem:[%s278 + $0x10] sm:$0xff]
      %v947 = vld [vmem:[%s278 + $0x18] sm:$0xff]
      %v948 = vld [vmem:[%s278 + $0x28] sm:$0xff]
      %v949 = vld [vmem:[%s278 + $0x30] sm:$0xff]
      %v950 = vld [vmem:[%s278 + $0x38] sm:$0xff]
      %v951 = vld [vmem:[%s278 + $0x40] sm:$0xff]
      %960 = vrot.lane.b32.xlu0 %v944, 87
      %v961 = vpop.permute.xlu0 %960
      %962 = vrot.lane.b32.xlu0 %v945, 87
      %v963 = vpop.permute.xlu0 %962
      %964 = vrot.lane.b32.xlu0 %v946, 87
      %v965 = vpop.permute.xlu0 %964
      %966 = vrot.lane.b32.xlu0 %v947, 87
      %v967 = vpop.permute.xlu0 %966
      %968 = vrot.lane.b32.xlu0 %v948, 87
      %v969 = vpop.permute.xlu0 %968
      %970 = vrot.lane.b32.xlu0 %v949, 87
      %v971 = vpop.permute.xlu0 %970
      %972 = vrot.lane.b32.xlu0 %v950, 87
      %v973 = vpop.permute.xlu0 %972
      %974 = vrot.lane.b32.xlu0 %v951, 87
      %v975 = vpop.permute.xlu0 %974
      %vm976 = vcmask 711680
      %v977 = vsel %vm976, %v961, %v963
      %v978 = vsel %vm976, %v963, %v965
      %v979 = vsel %vm976, %v965, %v967
      %v980 = vsel %vm976, %v969, %v971
      %v981 = vsel %vm976, %v971, %v973
      %v982 = vsel %vm976, %v973, %v975
      %989 = vst [vmem:[#allocation3 + $0x30] sm:$0xff] %v977
      %990 = vst [vmem:[#allocation3 + $0x38] sm:$0xff] %v978
      %991 = vst.msk [vmem:[#allocation3 + $0x40] sm:$0xff] %vm290, %v979
      %992 = vst [vmem:[#allocation3 + $0x48] sm:$0xff] %v980
      %993 = vst [vmem:[#allocation3 + $0x50] sm:$0xff] %v981
      %994 = vst.msk [vmem:[#allocation3 + $0x58] sm:$0xff] %vm290, %v982
      %v995 = vld [vmem:[%s278] sm:$0xff]
      %v996 = vld [vmem:[%s278 + $0x8] sm:$0xff]
      %v997 = vld [vmem:[%s278 + $0x10] sm:$0xff]
      %v998 = vld [vmem:[%s278 + $0x18] sm:$0xff]
      %v999 = vld [vmem:[%s278 + $0x28] sm:$0xff]
      %v1000 = vld [vmem:[%s278 + $0x30] sm:$0xff]
      %v1001 = vld [vmem:[%s278 + $0x38] sm:$0xff]
      %v1002 = vld [vmem:[%s278 + $0x40] sm:$0xff]
      %1011 = vrot.lane.b32.xlu0 %v995, 86
      %v1012 = vpop.permute.xlu0 %1011
      %1013 = vrot.lane.b32.xlu0 %v996, 86
      %v1014 = vpop.permute.xlu0 %1013
      %1015 = vrot.lane.b32.xlu0 %v997, 86
      %v1016 = vpop.permute.xlu0 %1015
      %1017 = vrot.lane.b32.xlu0 %v998, 86
      %v1018 = vpop.permute.xlu0 %1017
      %1019 = vrot.lane.b32.xlu0 %v999, 86
      %v1020 = vpop.permute.xlu0 %1019
      %1021 = vrot.lane.b32.xlu0 %v1000, 86
      %v1022 = vpop.permute.xlu0 %1021
      %1023 = vrot.lane.b32.xlu0 %v1001, 86
      %v1024 = vpop.permute.xlu0 %1023
      %1025 = vrot.lane.b32.xlu0 %v1002, 86
      %v1026 = vpop.permute.xlu0 %1025
      %vm1027 = vcmask 703488
      %v1028 = vsel %vm1027, %v1012, %v1014
      %v1029 = vsel %vm1027, %v1014, %v1016
      %v1030 = vsel %vm1027, %v1016, %v1018
      %v1031 = vsel %vm1027, %v1020, %v1022
      %v1032 = vsel %vm1027, %v1022, %v1024
      %v1033 = vsel %vm1027, %v1024, %v1026
      %1040 = vst [vmem:[#allocation3 + $0x60] sm:$0xff] %v1028
      %1041 = vst [vmem:[#allocation3 + $0x68] sm:$0xff] %v1029
      %1042 = vst.msk [vmem:[#allocation3 + $0x70] sm:$0xff] %vm290, %v1030
      %1043 = vst [vmem:[#allocation3 + $0x78] sm:$0xff] %v1031
      %1044 = vst [vmem:[#allocation3 + $0x80] sm:$0xff] %v1032
      %1045 = vst.msk [vmem:[#allocation3 + $0x88] sm:$0xff] %vm290, %v1033
      %s1046 = scalar_lea.vmem %s1, 32
      %v1047 = vld [vmem:[%s1046] sm:$0xff]
      %v1048 = vld [vmem:[%s1046 + $0x8] sm:$0xff]
      %v1049 = vld [vmem:[#allocation3] sm:$0xff]
      %v1050 = vld [vmem:[#allocation3 + $0x8] sm:$0xff]
      %v1051 = vld [vmem:[#allocation3 + $0x10] sm:$0xff]
      %v1052 = vld [vmem:[#allocation3 + $0x18] sm:$0xff]
      %v1053 = vld [vmem:[#allocation3 + $0x20] sm:$0xff]
      %v1054 = vld [vmem:[#allocation3 + $0x28] sm:$0xff]
      %v1055 = vld [vmem:[#allocation3 + $0x30] sm:$0xff]
      %v1056 = vld [vmem:[#allocation3 + $0x38] sm:$0xff]
      %v1057 = vld [vmem:[#allocation3 + $0x40] sm:$0xff]
      %v1058 = vld [vmem:[#allocation3 + $0x48] sm:$0xff]
      %v1059 = vld [vmem:[#allocation3 + $0x50] sm:$0xff]
      %v1060 = vld [vmem:[#allocation3 + $0x58] sm:$0xff]
      %v1061 = vld [vmem:[#allocation3 + $0x60] sm:$0xff]
      %v1062 = vld [vmem:[#allocation3 + $0x68] sm:$0xff]
      %v1063 = vld [vmem:[#allocation3 + $0x70] sm:$0xff]
      %v1064 = vld [vmem:[#allocation3 + $0x78] sm:$0xff]
      %v1065 = vld [vmem:[#allocation3 + $0x80] sm:$0xff]
      %v1066 = vld [vmem:[#allocation3 + $0x88] sm:$0xff]
      %v1068 = vsel %vm408, %v1047, 0
      %v1071 = vsel %vm408, %v1048, 0
      %1073 = vmatprep.subr.mxu0 %v1050
      %1074 = vmatpush1.msra.mxu0 %v1049
      %1075 = vmatprep.subr.mxu0 %v1053
      %1076 = vmatpush1.msra.mxu0 %v1052
      %1077 = vmatprep.subr.mxu0 %v1056
      %1078 = vmatpush1.msra.mxu0 %v1055
      %1079 = vmatprep.subr.mxu0 %v1059
      %1080 = vmatpush1.msra.mxu0 %v1058
      %1081 = vmatprep.subr.mxu0 %v1062
      %1082 = vmatpush1.msra.mxu0 %v1061
      %1083 = vmatprep.subr.mxu0 %v1065
      %1084 = vmatpush1.msra.mxu0 %v1064
      %1085 = vmatprep.subr.mxu0 0.0
      %1086 = vmatpush1.msra.mxu0 0.0
      %1087 = vmatprep.subr.mxu0 0.0
      %1088 = vmatpush1.msra.mxu0 0.0
      %1089 = vmatprep.subr.mxu0 0.0
      %1090 = vmatpush1.msra.mxu0 0.0
      %1091 = vmatprep.subr.mxu0 0.0
      %1092 = vmatpush1.msra.mxu0 0.0
      %1093 = vmatprep.subr.mxu0 0.0
      %1094 = vmatpush1.msra.mxu0 0.0
      %1095 = vmatprep.subr.mxu0 0.0
      %1096 = vmatpush1.msra.mxu0 0.0
      %1097 = vmatprep.subr.mxu0 0.0
      %1098 = vmatpush1.msra.mxu0 0.0
      %1099 = vmatprep.subr.mxu0 0.0
      %1100 = vmatpush1.msra.mxu0 0.0
      %1101 = vmatprep.subr.mxu0 0.0
      %1102 = vmatpush1.msra.mxu0 0.0
      %1103 = vmatprep.subr.mxu0 0.0
      %1104 = vmatpush1.msra.mxu0 0.0
      %1105 = vmatprep.subr.mxu0 0.0
      %1106 = vmatpush1.msra.mxu0 0.0
      %1107 = vmatprep.subr.mxu0 0.0
      %1108 = vmatpush1.msra.mxu0 0.0
      %1109 = vmatprep.subr.mxu0 0.0
      %1110 = vmatpush1.msra.mxu0 0.0
      %1111 = vmatprep.subr.mxu0 0.0
      %1112 = vmatpush1.msra.mxu0 0.0
      %1113 = vmatprep.subr.mxu0 0.0
      %1114 = vmatpush1.msra.mxu0 0.0
      %1115 = vmatprep.subr.mxu0 0.0
      %1116 = vmatpush1.msra.mxu0 0.0
      %1117 = vmatprep.subr.mxu0 0.0
      %1118 = vmatpush1.msra.mxu0 0.0
      %1119 = vmatprep.subr.mxu0 0.0
      %1120 = vmatpush1.msra.mxu0 0.0
      %1121 = vmatprep.subr.mxu0 0.0
      %1122 = vmatpush1.msra.mxu0 0.0
      %1123 = vmatprep.subr.mxu0 0.0
      %1124 = vmatpush1.msra.mxu0 0.0
      %1125 = vmatprep.subr.mxu0 0.0
      %1126 = vmatpush1.msra.mxu0 0.0
      %1127 = vmatprep.subr.mxu0 0.0
      %1128 = vmatpush1.msra.mxu0 0.0
      %1129 = vmatprep.subr.mxu0 0.0
      %1130 = vmatpush1.msra.mxu0 0.0
      %1131 = vmatprep.subr.mxu0 0.0
      %1132 = vmatpush1.msra.mxu0 0.0
      %1133 = vmatprep.subr.mxu0 0.0
      %1134 = vmatpush1.msra.mxu0 0.0
      %1135 = vmatprep.subr.mxu0 0.0
      %1136 = vmatpush1.msra.mxu0 0.0
      %1137 = vmatprep.mubr.f32.mxu0 0.0
      %1138 = vmatmul.mubr.f32.gmra.mrb[0].mxu0 %v1068
      %v1139 = vpop.f32.mrb[0].mxu0
      %v1140 = vadd.f32 0.0, %v1139
      %v1141 = vpop.f32.mrb[0].mxu0
      %v1142 = vadd.f32 0.0, %v1141
      %1143 = vmatprep.mubr.f32.mxu0 0.0
      %1144 = vmatmul.mubr.f32.gmra.mrb[0].mxu0 %v1071
      %v1145 = vpop.f32.mrb[0].mxu0
      %v1146 = vadd.f32 0.0, %v1145
      %v1147 = vpop.f32.mrb[0].mxu0
      %v1148 = vadd.f32 0.0, %v1147
      %1149 = vdwg.mxu0
      %1150 = vmatprep.subr.mxu0 0.0
      %1151 = vmatpush1.msra.mxu0 %v1051
      %1152 = vmatprep.subr.mxu0 0.0
      %1153 = vmatpush1.msra.mxu0 %v1054
      %1154 = vmatprep.subr.mxu0 0.0
      %1155 = vmatpush1.msra.mxu0 %v1057
      %1156 = vmatprep.subr.mxu0 0.0
      %1157 = vmatpush1.msra.mxu0 %v1060
      %1158 = vmatprep.subr.mxu0 0.0
      %1159 = vmatpush1.msra.mxu0 %v1063
      %1160 = vmatprep.subr.mxu0 0.0
      %1161 = vmatpush1.msra.mxu0 %v1066
      %1162 = vmatprep.subr.mxu0 0.0
      %1163 = vmatpush1.msra.mxu0 0.0
      %1164 = vmatprep.subr.mxu0 0.0
      %1165 = vmatpush1.msra.mxu0 0.0
      %1166 = vmatprep.subr.mxu0 0.0
      %1167 = vmatpush1.msra.mxu0 0.0
      %1168 = vmatprep.subr.mxu0 0.0
      %1169 = vmatpush1.msra.mxu0 0.0
      %1170 = vmatprep.subr.mxu0 0.0
      %1171 = vmatpush1.msra.mxu0 0.0
      %1172 = vmatprep.subr.mxu0 0.0
      %1173 = vmatpush1.msra.mxu0 0.0
      %1174 = vmatprep.subr.mxu0 0.0
      %1175 = vmatpush1.msra.mxu0 0.0
      %1176 = vmatprep.subr.mxu0 0.0
      %1177 = vmatpush1.msra.mxu0 0.0
      %1178 = vmatprep.subr.mxu0 0.0
      %1179 = vmatpush1.msra.mxu0 0.0
      %1180 = vmatprep.subr.mxu0 0.0
      %1181 = vmatpush1.msra.mxu0 0.0
      %1182 = vmatprep.subr.mxu0 0.0
      %1183 = vmatpush1.msra.mxu0 0.0
      %1184 = vmatprep.subr.mxu0 0.0
      %1185 = vmatpush1.msra.mxu0 0.0
      %1186 = vmatprep.subr.mxu0 0.0
      %1187 = vmatpush1.msra.mxu0 0.0
      %1188 = vmatprep.subr.mxu0 0.0
      %1189 = vmatpush1.msra.mxu0 0.0
      %1190 = vmatprep.subr.mxu0 0.0
      %1191 = vmatpush1.msra.mxu0 0.0
      %1192 = vmatprep.subr.mxu0 0.0
      %1193 = vmatpush1.msra.mxu0 0.0
      %1194 = vmatprep.subr.mxu0 0.0
      %1195 = vmatpush1.msra.mxu0 0.0
      %1196 = vmatprep.subr.mxu0 0.0
      %1197 = vmatpush1.msra.mxu0 0.0
      %1198 = vmatprep.subr.mxu0 0.0
      %1199 = vmatpush1.msra.mxu0 0.0
      %1200 = vmatprep.subr.mxu0 0.0
      %1201 = vmatpush1.msra.mxu0 0.0
      %1202 = vmatprep.subr.mxu0 0.0
      %1203 = vmatpush1.msra.mxu0 0.0
      %1204 = vmatprep.subr.mxu0 0.0
      %1205 = vmatpush1.msra.mxu0 0.0
      %1206 = vmatprep.subr.mxu0 0.0
      %1207 = vmatpush1.msra.mxu0 0.0
      %1208 = vmatprep.subr.mxu0 0.0
      %1209 = vmatpush1.msra.mxu0 0.0
      %1210 = vmatprep.subr.mxu0 0.0
      %1211 = vmatpush1.msra.mxu0 0.0
      %1212 = vmatprep.subr.mxu0 0.0
      %1213 = vmatpush1.msra.mxu0 0.0
      %1214 = vmatprep.mubr.f32.mxu0 0.0
      %1215 = vmatmul.mubr.f32.gmra.mrb[0].mxu0 %v1068
      %v1216 = vpop.f32.mrb[0].mxu0
      %v1217 = vadd.f32 0.0, %v1216
      %v1218 = vpop.f32.mrb[0].mxu0
      %1219 = vmatprep.mubr.f32.mxu0 0.0
      %1220 = vmatmul.mubr.f32.gmra.mrb[0].mxu0 %v1071
      %v1221 = vpop.f32.mrb[0].mxu0
      %v1222 = vadd.f32 0.0, %v1221
      %v1223 = vpop.f32.mrb[0].mxu0
      %1224 = vdwg.mxu0
      %v1225 = vld [vmem:[#allocation2] sm:$0xff]
      %v1226 = vld [vmem:[#allocation2 + $0x8] sm:$0xff]
      %v1227 = vld [vmem:[#allocation2 + $0x10] sm:$0xff]
      %v1228 = vld [vmem:[#allocation2 + $0x20] sm:$0xff]
      %v1229 = vld [vmem:[#allocation2 + $0x28] sm:$0xff]
      %v1230 = vld [vmem:[#allocation2 + $0x30] sm:$0xff]
      %v1231 = vadd.f32 %v1225, %v1140
      %v1232 = vadd.f32 %v1226, %v1142
      %v1233 = vadd.f32 %v1227, %v1217
      %v1234 = vadd.f32 %v1228, %v1146
      %v1235 = vadd.f32 %v1229, %v1148
      %v1236 = vadd.f32 %v1230, %v1222
      %1237 = vst [vmem:[#allocation2] sm:$0xff] %v1231
      %1238 = vst [vmem:[#allocation2 + $0x8] sm:$0xff] %v1232
      %1239 = vst.msk [vmem:[#allocation2 + $0x10] sm:$0xff] %vm290, %v1233
      %1240 = vst [vmem:[#allocation2 + $0x20] sm:$0xff] %v1234
      %1241 = vst [vmem:[#allocation2 + $0x28] sm:$0xff] %v1235
      %1242 = vst.msk [vmem:[#allocation2 + $0x30] sm:$0xff] %vm290, %v1236
      %v1243 = vld [vmem:[#allocation2] sm:$0xff]
      %v1244 = vld [vmem:[#allocation2 + $0x8] sm:$0xff]
      %v1245 = vld [vmem:[#allocation2 + $0x10] sm:$0xff]
      %v1246 = vld [vmem:[#allocation2 + $0x20] sm:$0xff]
      %v1247 = vld [vmem:[#allocation2 + $0x28] sm:$0xff]
      %v1248 = vld [vmem:[#allocation2 + $0x30] sm:$0xff]
      %v1249 = vld [vmem:[%s2] sm:$0xff]
      %v1250 = vld [vmem:[%s2 + $0x8] sm:$0xff]
      %1252 = vset.pattern.permute.xlu0 0
      %1253 = vperm.xlu0 %1252, %v1249
      %v1254 = vpop.permute.xlu0 %1253
      %1257 = vset.pattern.permute.xlu0 0
      %1258 = vperm.xlu0 %1257, %v1250
      %v1259 = vpop.permute.xlu0 %1258
      %v1261 = vadd.f32 %v1243, %v1254
      %v1262 = vadd.f32 %v1244, %v1254
      %v1263 = vadd.f32 %v1245, %v1254
      %v1264 = vadd.f32 %v1246, %v1259
      %v1265 = vadd.f32 %v1247, %v1259
      %v1266 = vadd.f32 %v1248, %v1259
      %v1267 = vmax.f32 %v1261, 0.0
      %v1268 = vmax.f32 %v1262, 0.0
      %v1269 = vmax.f32 %v1263, 0.0
      %v1270 = vmax.f32 %v1264, 0.0
      %v1271 = vmax.f32 %v1265, 0.0
      %v1272 = vmax.f32 %v1266, 0.0
      %v1273 = vld [vmem:[%s5] sm:$0x7]
      %v1275 = vlaneseq
      %v1276 = vshrl.u32 %v1275, 7
      %v1277 = vsub.s32 0, %v1276
      %v1278 = vrot.slane %v1273, %v1277
      %v1279 = vlaneseq
      %v1280 = vshrl.u32 %v1279, 7
      %v1281 = vsub.s32 1, %v1280
      %v1282 = vrot.slane %v1273, %v1281
      %v1283 = vlaneseq
      %v1284 = vshrl.u32 %v1283, 7
      %v1285 = vsub.s32 2, %v1284
      %v1286 = vrot.slane %v1273, %v1285
      %v1290 = vmul.f32 %v1267, %v1278
      %v1291 = vmul.f32 %v1268, %v1282
      %v1292 = vmul.f32 %v1269, %v1286
      %v1293 = vmul.f32 %v1270, %v1278
      %v1294 = vmul.f32 %v1271, %v1282
      %v1295 = vmul.f32 %v1272, %v1286
      %1296 = vst [vmem:[#allocation2] sm:$0xff] %v1290
      %1297 = vst [vmem:[#allocation2 + $0x8] sm:$0xff] %v1291
      %1298 = vst.msk [vmem:[#allocation2 + $0x10] sm:$0xff] %vm290, %v1292
      %1299 = vst [vmem:[#allocation2 + $0x20] sm:$0xff] %v1293
      %1300 = vst [vmem:[#allocation2 + $0x28] sm:$0xff] %v1294
      %1301 = vst.msk [vmem:[#allocation2 + $0x30] sm:$0xff] %vm290, %v1295
      %p1302 = scmp.eq.s32.totalorder %s22, 0
      // Predicated region
      $region45: #{residual_block_nobn.1} parent=43 // pred_check
        %p1303 = pneg %p1302
      $region46: #{residual_block_nobn.1} parent=43 // pred_check_branch
        %1305 = sbr.rel (%p1303) target = $region48
      $region47: #{residual_block_nobn.1} parent=43 // pred_region
        %vm1306 = vcmask 162816
        %1307 = vst.msk [vmem:[#allocation2] sm:$0xff] %vm1306, 0.0
        %1308 = vst.msk [vmem:[#allocation2 + $0x20] sm:$0xff] %vm1306, 0.0
        %vm1309 = vcmask 851616
        %1310 = vst.msk [vmem:[#allocation2 + $0x10] sm:$0xff] %vm1309, 0.0
        %1311 = vst.msk [vmem:[#allocation2 + $0x30] sm:$0xff] %vm1309, 0.0
      $region48: #{residual_block_nobn.1} parent=43 // pred_fallthru
        _
      %v1312 = vld [vmem:[#allocation2] sm:$0xff]
      %v1313 = vld [vmem:[#allocation2 + $0x8] sm:$0xff]
      %v1314 = vld [vmem:[#allocation2 + $0x10] sm:$0xff]
      %v1315 = vld [vmem:[#allocation2 + $0x20] sm:$0xff]
      %v1316 = vld [vmem:[#allocation2 + $0x28] sm:$0xff]
      %v1317 = vld [vmem:[#allocation2 + $0x30] sm:$0xff]
      %1318 = vst [vmem:[#allocation3] sm:$0xff] %v1312
      %1319 = vst [vmem:[#allocation3 + $0x8] sm:$0xff] %v1313
      %vm1320 = vcmask 523264
      %1321 = vst.msk [vmem:[#allocation3 + $0x10] sm:$0xff] %vm1320, %v1314
      %1322 = vst [vmem:[#allocation3 + $0x18] sm:$0xff] %v1315
      %1323 = vst [vmem:[#allocation3 + $0x20] sm:$0xff] %v1316
      %1324 = vst.msk [vmem:[#allocation3 + $0x28] sm:$0xff] %vm1320, %v1317
      %v1325 = vld [vmem:[#allocation2] sm:$0xff]
      %v1326 = vld [vmem:[#allocation2 + $0x8] sm:$0xff]
      %v1327 = vld [vmem:[#allocation2 + $0x10] sm:$0xff]
      %v1328 = vld [vmem:[#allocation2 + $0x20] sm:$0xff]
      %v1329 = vld [vmem:[#allocation2 + $0x28] sm:$0xff]
      %v1330 = vld [vmem:[#allocation2 + $0x30] sm:$0xff]
      %1337 = vrot.lane.b32.xlu0 %v1325, 127
      %v1338 = vpop.permute.xlu0 %1337
      %1339 = vrot.lane.b32.xlu0 %v1326, 127
      %v1340 = vpop.permute.xlu0 %1339
      %1341 = vrot.lane.b32.xlu0 %v1327, 127
      %v1342 = vpop.permute.xlu0 %1341
      %1343 = vrot.lane.b32.xlu0 %v1328, 127
      %v1344 = vpop.permute.xlu0 %1343
      %1345 = vrot.lane.b32.xlu0 %v1329, 127
      %v1346 = vpop.permute.xlu0 %1345
      %1347 = vrot.lane.b32.xlu0 %v1330, 127
      %v1348 = vpop.permute.xlu0 %1347
      %v1349 = vsel %vm330, %v1338, %v1340
      %v1350 = vsel %vm330, %v1340, %v1342
      %v1351 = vsel %vm330, %v1344, %v1346
      %v1352 = vsel %vm330, %v1346, %v1348
      %1359 = vst [vmem:[#allocation3 + $0x30] sm:$0xff] %v1349
      %1360 = vst [vmem:[#allocation3 + $0x38] sm:$0xff] %v1350
      %1361 = vst.msk [vmem:[#allocation3 + $0x40] sm:$0xff] %vm1320, %v1342
      %1362 = vst [vmem:[#allocation3 + $0x48] sm:$0xff] %v1351
      %1363 = vst [vmem:[#allocation3 + $0x50] sm:$0xff] %v1352
      %1364 = vst.msk [vmem:[#allocation3 + $0x58] sm:$0xff] %vm1320, %v1348
      %v1365 = vld [vmem:[#allocation2] sm:$0xff]
      %v1366 = vld [vmem:[#allocation2 + $0x8] sm:$0xff]
      %v1367 = vld [vmem:[#allocation2 + $0x10] sm:$0xff]
      %v1368 = vld [vmem:[#allocation2 + $0x20] sm:$0xff]
      %v1369 = vld [vmem:[#allocation2 + $0x28] sm:$0xff]
      %v1370 = vld [vmem:[#allocation2 + $0x30] sm:$0xff]
      %1377 = vrot.lane.b32.xlu0 %v1365, 126
      %v1378 = vpop.permute.xlu0 %1377
      %1379 = vrot.lane.b32.xlu0 %v1366, 126
      %v1380 = vpop.permute.xlu0 %1379
      %1381 = vrot.lane.b32.xlu0 %v1367, 126
      %v1382 = vpop.permute.xlu0 %1381
      %1383 = vrot.lane.b32.xlu0 %v1368, 126
      %v1384 = vpop.permute.xlu0 %1383
      %1385 = vrot.lane.b32.xlu0 %v1369, 126
      %v1386 = vpop.permute.xlu0 %1385
      %1387 = vrot.lane.b32.xlu0 %v1370, 126
      %v1388 = vpop.permute.xlu0 %1387
      %v1389 = vsel %vm371, %v1378, %v1380
      %v1390 = vsel %vm371, %v1380, %v1382
      %v1391 = vsel %vm371, %v1384, %v1386
      %v1392 = vsel %vm371, %v1386, %v1388
      %1399 = vst [vmem:[#allocation3 + $0x60] sm:$0xff] %v1389
      %1400 = vst [vmem:[#allocation3 + $0x68] sm:$0xff] %v1390
      %1401 = vst.msk [vmem:[#allocation3 + $0x70] sm:$0xff] %vm1320, %v1382
      %1402 = vst [vmem:[#allocation3 + $0x78] sm:$0xff] %v1391
      %1403 = vst [vmem:[#allocation3 + $0x80] sm:$0xff] %v1392
      %1404 = vst.msk [vmem:[#allocation3 + $0x88] sm:$0xff] %vm1320, %v1388
      %v1405 = vld [vmem:[%s3] sm:$0xff]
      %v1406 = vld [vmem:[%s3 + $0x8] sm:$0xff]
      %v1407 = vld [vmem:[#allocation3] sm:$0xff]
      %v1408 = vld [vmem:[#allocation3 + $0x8] sm:$0xff]
      %v1409 = vld [vmem:[#allocation3 + $0x10] sm:$0xff]
      %v1410 = vld [vmem:[#allocation3 + $0x18] sm:$0xff]
      %v1411 = vld [vmem:[#allocation3 + $0x20] sm:$0xff]
      %v1412 = vld [vmem:[#allocation3 + $0x28] sm:$0xff]
      %v1413 = vld [vmem:[#allocation3 + $0x30] sm:$0xff]
      %v1414 = vld [vmem:[#allocation3 + $0x38] sm:$0xff]
      %v1415 = vld [vmem:[#allocation3 + $0x40] sm:$0xff]
      %v1416 = vld [vmem:[#allocation3 + $0x48] sm:$0xff]
      %v1417 = vld [vmem:[#allocation3 + $0x50] sm:$0xff]
      %v1418 = vld [vmem:[#allocation3 + $0x58] sm:$0xff]
      %v1419 = vld [vmem:[#allocation3 + $0x60] sm:$0xff]
      %v1420 = vld [vmem:[#allocation3 + $0x68] sm:$0xff]
      %v1421 = vld [vmem:[#allocation3 + $0x70] sm:$0xff]
      %v1422 = vld [vmem:[#allocation3 + $0x78] sm:$0xff]
      %v1423 = vld [vmem:[#allocation3 + $0x80] sm:$0xff]
      %v1424 = vld [vmem:[#allocation3 + $0x88] sm:$0xff]
      %v1426 = vsel %vm408, %v1405, 0
      %v1429 = vsel %vm408, %v1406, 0
      %1431 = vmatprep.subr.mxu0 %v1408
      %1432 = vmatpush1.msra.mxu0 %v1407
      %1433 = vmatprep.subr.mxu0 %v1411
      %1434 = vmatpush1.msra.mxu0 %v1410
      %1435 = vmatprep.subr.mxu0 %v1414
      %1436 = vmatpush1.msra.mxu0 %v1413
      %1437 = vmatprep.subr.mxu0 %v1417
      %1438 = vmatpush1.msra.mxu0 %v1416
      %1439 = vmatprep.subr.mxu0 %v1420
      %1440 = vmatpush1.msra.mxu0 %v1419
      %1441 = vmatprep.subr.mxu0 %v1423
      %1442 = vmatpush1.msra.mxu0 %v1422
      %1443 = vmatprep.subr.mxu0 0.0
      %1444 = vmatpush1.msra.mxu0 0.0
      %1445 = vmatprep.subr.mxu0 0.0
      %1446 = vmatpush1.msra.mxu0 0.0
      %1447 = vmatprep.subr.mxu0 0.0
      %1448 = vmatpush1.msra.mxu0 0.0
      %1449 = vmatprep.subr.mxu0 0.0
      %1450 = vmatpush1.msra.mxu0 0.0
      %1451 = vmatprep.subr.mxu0 0.0
      %1452 = vmatpush1.msra.mxu0 0.0
      %1453 = vmatprep.subr.mxu0 0.0
      %1454 = vmatpush1.msra.mxu0 0.0
      %1455 = vmatprep.subr.mxu0 0.0
      %1456 = vmatpush1.msra.mxu0 0.0
      %1457 = vmatprep.subr.mxu0 0.0
      %1458 = vmatpush1.msra.mxu0 0.0
      %1459 = vmatprep.subr.mxu0 0.0
      %1460 = vmatpush1.msra.mxu0 0.0
      %1461 = vmatprep.subr.mxu0 0.0
      %1462 = vmatpush1.msra.mxu0 0.0
      %1463 = vmatprep.subr.mxu0 0.0
      %1464 = vmatpush1.msra.mxu0 0.0
      %1465 = vmatprep.subr.mxu0 0.0
      %1466 = vmatpush1.msra.mxu0 0.0
      %1467 = vmatprep.subr.mxu0 0.0
      %1468 = vmatpush1.msra.mxu0 0.0
      %1469 = vmatprep.subr.mxu0 0.0
      %1470 = vmatpush1.msra.mxu0 0.0
      %1471 = vmatprep.subr.mxu0 0.0
      %1472 = vmatpush1.msra.mxu0 0.0
      %1473 = vmatprep.subr.mxu0 0.0
      %1474 = vmatpush1.msra.mxu0 0.0
      %1475 = vmatprep.subr.mxu0 0.0
      %1476 = vmatpush1.msra.mxu0 0.0
      %1477 = vmatprep.subr.mxu0 0.0
      %1478 = vmatpush1.msra.mxu0 0.0
      %1479 = vmatprep.subr.mxu0 0.0
      %1480 = vmatpush1.msra.mxu0 0.0
      %1481 = vmatprep.subr.mxu0 0.0
      %1482 = vmatpush1.msra.mxu0 0.0
      %1483 = vmatprep.subr.mxu0 0.0
      %1484 = vmatpush1.msra.mxu0 0.0
      %1485 = vmatprep.subr.mxu0 0.0
      %1486 = vmatpush1.msra.mxu0 0.0
      %1487 = vmatprep.subr.mxu0 0.0
      %1488 = vmatpush1.msra.mxu0 0.0
      %1489 = vmatprep.subr.mxu0 0.0
      %1490 = vmatpush1.msra.mxu0 0.0
      %1491 = vmatprep.subr.mxu0 0.0
      %1492 = vmatpush1.msra.mxu0 0.0
      %1493 = vmatprep.subr.mxu0 0.0
      %1494 = vmatpush1.msra.mxu0 0.0
      %1495 = vmatprep.mubr.f32.mxu0 0.0
      %1496 = vmatmul.mubr.f32.gmra.mrb[0].mxu0 %v1426
      %v1497 = vpop.f32.mrb[0].mxu0
      %v1498 = vadd.f32 0.0, %v1497
      %v1499 = vpop.f32.mrb[0].mxu0
      %v1500 = vadd.f32 0.0, %v1499
      %1501 = vmatprep.mubr.f32.mxu0 0.0
      %1502 = vmatmul.mubr.f32.gmra.mrb[0].mxu0 %v1429
      %v1503 = vpop.f32.mrb[0].mxu0
      %v1504 = vadd.f32 0.0, %v1503
      %v1505 = vpop.f32.mrb[0].mxu0
      %v1506 = vadd.f32 0.0, %v1505
      %1507 = vdwg.mxu0
      %1508 = vmatprep.subr.mxu0 0.0
      %1509 = vmatpush1.msra.mxu0 %v1409
      %1510 = vmatprep.subr.mxu0 0.0
      %1511 = vmatpush1.msra.mxu0 %v1412
      %1512 = vmatprep.subr.mxu0 0.0
      %1513 = vmatpush1.msra.mxu0 %v1415
      %1514 = vmatprep.subr.mxu0 0.0
      %1515 = vmatpush1.msra.mxu0 %v1418
      %1516 = vmatprep.subr.mxu0 0.0
      %1517 = vmatpush1.msra.mxu0 %v1421
      %1518 = vmatprep.subr.mxu0 0.0
      %1519 = vmatpush1.msra.mxu0 %v1424
      %1520 = vmatprep.subr.mxu0 0.0
      %1521 = vmatpush1.msra.mxu0 0.0
      %1522 = vmatprep.subr.mxu0 0.0
      %1523 = vmatpush1.msra.mxu0 0.0
      %1524 = vmatprep.subr.mxu0 0.0
      %1525 = vmatpush1.msra.mxu0 0.0
      %1526 = vmatprep.subr.mxu0 0.0
      %1527 = vmatpush1.msra.mxu0 0.0
      %1528 = vmatprep.subr.mxu0 0.0
      %1529 = vmatpush1.msra.mxu0 0.0
      %1530 = vmatprep.subr.mxu0 0.0
      %1531 = vmatpush1.msra.mxu0 0.0
      %1532 = vmatprep.subr.mxu0 0.0
      %1533 = vmatpush1.msra.mxu0 0.0
      %1534 = vmatprep.subr.mxu0 0.0
      %1535 = vmatpush1.msra.mxu0 0.0
      %1536 = vmatprep.subr.mxu0 0.0
      %1537 = vmatpush1.msra.mxu0 0.0
      %1538 = vmatprep.subr.mxu0 0.0
      %1539 = vmatpush1.msra.mxu0 0.0
      %1540 = vmatprep.subr.mxu0 0.0
      %1541 = vmatpush1.msra.mxu0 0.0
      %1542 = vmatprep.subr.mxu0 0.0
      %1543 = vmatpush1.msra.mxu0 0.0
      %1544 = vmatprep.subr.mxu0 0.0
      %1545 = vmatpush1.msra.mxu0 0.0
      %1546 = vmatprep.subr.mxu0 0.0
      %1547 = vmatpush1.msra.mxu0 0.0
      %1548 = vmatprep.subr.mxu0 0.0
      %1549 = vmatpush1.msra.mxu0 0.0
      %1550 = vmatprep.subr.mxu0 0.0
      %1551 = vmatpush1.msra.mxu0 0.0
      %1552 = vmatprep.subr.mxu0 0.0
      %1553 = vmatpush1.msra.mxu0 0.0
      %1554 = vmatprep.subr.mxu0 0.0
      %1555 = vmatpush1.msra.mxu0 0.0
      %1556 = vmatprep.subr.mxu0 0.0
      %1557 = vmatpush1.msra.mxu0 0.0
      %1558 = vmatprep.subr.mxu0 0.0
      %1559 = vmatpush1.msra.mxu0 0.0
      %1560 = vmatprep.subr.mxu0 0.0
      %1561 = vmatpush1.msra.mxu0 0.0
      %1562 = vmatprep.subr.mxu0 0.0
      %1563 = vmatpush1.msra.mxu0 0.0
      %1564 = vmatprep.subr.mxu0 0.0
      %1565 = vmatpush1.msra.mxu0 0.0
      %1566 = vmatprep.subr.mxu0 0.0
      %1567 = vmatpush1.msra.mxu0 0.0
      %1568 = vmatprep.subr.mxu0 0.0
      %1569 = vmatpush1.msra.mxu0 0.0
      %1570 = vmatprep.subr.mxu0 0.0
      %1571 = vmatpush1.msra.mxu0 0.0
      %1572 = vmatprep.mubr.f32.mxu0 0.0
      %1573 = vmatmul.mubr.f32.gmra.mrb[0].mxu0 %v1426
      %v1574 = vpop.f32.mrb[0].mxu0
      %v1575 = vadd.f32 0.0, %v1574
      %v1576 = vpop.f32.mrb[0].mxu0
      %1577 = vmatprep.mubr.f32.mxu0 0.0
      %1578 = vmatmul.mubr.f32.gmra.mrb[0].mxu0 %v1429
      %v1579 = vpop.f32.mrb[0].mxu0
      %v1580 = vadd.f32 0.0, %v1579
      %v1581 = vpop.f32.mrb[0].mxu0
      %1582 = vdwg.mxu0
      %1583 = vst [vmem:[%s287] sm:$0xff] %v1498
      %1584 = vst [vmem:[%s287 + $0x8] sm:$0xff] %v1500
      %1585 = vst.msk [vmem:[%s287 + $0x10] sm:$0xff] %vm1320, %v1575
      %1586 = vst [vmem:[%s287 + $0x18] sm:$0xff] %v1504
      %1587 = vst [vmem:[%s287 + $0x20] sm:$0xff] %v1506
      %1588 = vst.msk [vmem:[%s287 + $0x28] sm:$0xff] %vm1320, %v1580
      %v1589 = vld [vmem:[#allocation2] sm:$0xff]
      %v1590 = vld [vmem:[#allocation2 + $0x8] sm:$0xff]
      %v1591 = vld [vmem:[#allocation2 + $0x10] sm:$0xff]
      %v1592 = vld [vmem:[#allocation2 + $0x20] sm:$0xff]
      %v1593 = vld [vmem:[#allocation2 + $0x28] sm:$0xff]
      %v1594 = vld [vmem:[#allocation2 + $0x30] sm:$0xff]
      %1601 = vrot.lane.b32.xlu0 %v1589, 108
      %v1602 = vpop.permute.xlu0 %1601
      %1603 = vrot.lane.b32.xlu0 %v1590, 108
      %v1604 = vpop.permute.xlu0 %1603
      %1605 = vrot.lane.b32.xlu0 %v1591, 108
      %v1606 = vpop.permute.xlu0 %1605
      %1607 = vrot.lane.b32.xlu0 %v1592, 108
      %v1608 = vpop.permute.xlu0 %1607
      %1609 = vrot.lane.b32.xlu0 %v1593, 108
      %v1610 = vpop.permute.xlu0 %1609
      %1611 = vrot.lane.b32.xlu0 %v1594, 108
      %v1612 = vpop.permute.xlu0 %1611
      %v1613 = vsel %vm597, %v1602, %v1604
      %v1614 = vsel %vm597, %v1604, %v1606
      %v1615 = vsel %vm597, %v1608, %v1610
      %v1616 = vsel %vm597, %v1610, %v1612
      %1623 = vst [vmem:[#allocation3] sm:$0xff] %v1613
      %1624 = vst [vmem:[#allocation3 + $0x8] sm:$0xff] %v1614
      %1625 = vst.msk [vmem:[#allocation3 + $0x10] sm:$0xff] %vm1320, %v1606
      %1626 = vst [vmem:[#allocation3 + $0x18] sm:$0xff] %v1615
      %1627 = vst [vmem:[#allocation3 + $0x20] sm:$0xff] %v1616
      %1628 = vst.msk [vmem:[#allocation3 + $0x28] sm:$0xff] %vm1320, %v1612
      %v1629 = vld [vmem:[#allocation2] sm:$0xff]
      %v1630 = vld [vmem:[#allocation2 + $0x8] sm:$0xff]
      %v1631 = vld [vmem:[#allocation2 + $0x10] sm:$0xff]
      %v1632 = vld [vmem:[#allocation2 + $0x20] sm:$0xff]
      %v1633 = vld [vmem:[#allocation2 + $0x28] sm:$0xff]
      %v1634 = vld [vmem:[#allocation2 + $0x30] sm:$0xff]
      %1641 = vrot.lane.b32.xlu0 %v1629, 107
      %v1642 = vpop.permute.xlu0 %1641
      %1643 = vrot.lane.b32.xlu0 %v1630, 107
      %v1644 = vpop.permute.xlu0 %1643
      %1645 = vrot.lane.b32.xlu0 %v1631, 107
      %v1646 = vpop.permute.xlu0 %1645
      %1647 = vrot.lane.b32.xlu0 %v1632, 107
      %v1648 = vpop.permute.xlu0 %1647
      %1649 = vrot.lane.b32.xlu0 %v1633, 107
      %v1650 = vpop.permute.xlu0 %1649
      %1651 = vrot.lane.b32.xlu0 %v1634, 107
      %v1652 = vpop.permute.xlu0 %1651
      %v1653 = vsel %vm638, %v1642, %v1644
      %v1654 = vsel %vm638, %v1644, %v1646
      %v1655 = vsel %vm638, %v1648, %v1650
      %v1656 = vsel %vm638, %v1650, %v1652
      %1663 = vst [vmem:[#allocation3 + $0x30] sm:$0xff] %v1653
      %1664 = vst [vmem:[#allocation3 + $0x38] sm:$0xff] %v1654
      %1665 = vst.msk [vmem:[#allocation3 + $0x40] sm:$0xff] %vm1320, %v1646
      %1666 = vst [vmem:[#allocation3 + $0x48] sm:$0xff] %v1655
      %1667 = vst [vmem:[#allocation3 + $0x50] sm:$0xff] %v1656
      %1668 = vst.msk [vmem:[#allocation3 + $0x58] sm:$0xff] %vm1320, %v1652
      %v1669 = vld [vmem:[#allocation2] sm:$0xff]
      %v1670 = vld [vmem:[#allocation2 + $0x8] sm:$0xff]
      %v1671 = vld [vmem:[#allocation2 + $0x10] sm:$0xff]
      %v1672 = vld [vmem:[#allocation2 + $0x20] sm:$0xff]
      %v1673 = vld [vmem:[#allocation2 + $0x28] sm:$0xff]
      %v1674 = vld [vmem:[#allocation2 + $0x30] sm:$0xff]
      %1681 = vrot.lane.b32.xlu0 %v1669, 106
      %v1682 = vpop.permute.xlu0 %1681
      %1683 = vrot.lane.b32.xlu0 %v1670, 106
      %v1684 = vpop.permute.xlu0 %1683
      %1685 = vrot.lane.b32.xlu0 %v1671, 106
      %v1686 = vpop.permute.xlu0 %1685
      %1687 = vrot.lane.b32.xlu0 %v1672, 106
      %v1688 = vpop.permute.xlu0 %1687
      %1689 = vrot.lane.b32.xlu0 %v1673, 106
      %v1690 = vpop.permute.xlu0 %1689
      %1691 = vrot.lane.b32.xlu0 %v1674, 106
      %v1692 = vpop.permute.xlu0 %1691
      %v1693 = vsel %vm679, %v1682, %v1684
      %v1694 = vsel %vm679, %v1684, %v1686
      %v1695 = vsel %vm679, %v1688, %v1690
      %v1696 = vsel %vm679, %v1690, %v1692
      %1703 = vst [vmem:[#allocation3 + $0x60] sm:$0xff] %v1693
      %1704 = vst [vmem:[#allocation3 + $0x68] sm:$0xff] %v1694
      %1705 = vst.msk [vmem:[#allocation3 + $0x70] sm:$0xff] %vm1320, %v1686
      %1706 = vst [vmem:[#allocation3 + $0x78] sm:$0xff] %v1695
      %1707 = vst [vmem:[#allocation3 + $0x80] sm:$0xff] %v1696
      %1708 = vst.msk [vmem:[#allocation3 + $0x88] sm:$0xff] %vm1320, %v1692
      %s1709 = scalar_lea.vmem %s3, 16
      %v1710 = vld [vmem:[%s1709] sm:$0xff]
      %v1711 = vld [vmem:[%s1709 + $0x8] sm:$0xff]
      %v1712 = vld [vmem:[#allocation3] sm:$0xff]
      %v1713 = vld [vmem:[#allocation3 + $0x8] sm:$0xff]
      %v1714 = vld [vmem:[#allocation3 + $0x10] sm:$0xff]
      %v1715 = vld [vmem:[#allocation3 + $0x18] sm:$0xff]
      %v1716 = vld [vmem:[#allocation3 + $0x20] sm:$0xff]
      %v1717 = vld [vmem:[#allocation3 + $0x28] sm:$0xff]
      %v1718 = vld [vmem:[#allocation3 + $0x30] sm:$0xff]
      %v1719 = vld [vmem:[#allocation3 + $0x38] sm:$0xff]
      %v1720 = vld [vmem:[#allocation3 + $0x40] sm:$0xff]
      %v1721 = vld [vmem:[#allocation3 + $0x48] sm:$0xff]
      %v1722 = vld [vmem:[#allocation3 + $0x50] sm:$0xff]
      %v1723 = vld [vmem:[#allocation3 + $0x58] sm:$0xff]
      %v1724 = vld [vmem:[#allocation3 + $0x60] sm:$0xff]
      %v1725 = vld [vmem:[#allocation3 + $0x68] sm:$0xff]
      %v1726 = vld [vmem:[#allocation3 + $0x70] sm:$0xff]
      %v1727 = vld [vmem:[#allocation3 + $0x78] sm:$0xff]
      %v1728 = vld [vmem:[#allocation3 + $0x80] sm:$0xff]
      %v1729 = vld [vmem:[#allocation3 + $0x88] sm:$0xff]
      %v1731 = vsel %vm408, %v1710, 0
      %v1734 = vsel %vm408, %v1711, 0
      %1736 = vmatprep.subr.mxu0 %v1713
      %1737 = vmatpush1.msra.mxu0 %v1712
      %1738 = vmatprep.subr.mxu0 %v1716
      %1739 = vmatpush1.msra.mxu0 %v1715
      %1740 = vmatprep.subr.mxu0 %v1719
      %1741 = vmatpush1.msra.mxu0 %v1718
      %1742 = vmatprep.subr.mxu0 %v1722
      %1743 = vmatpush1.msra.mxu0 %v1721
      %1744 = vmatprep.subr.mxu0 %v1725
      %1745 = vmatpush1.msra.mxu0 %v1724
      %1746 = vmatprep.subr.mxu0 %v1728
      %1747 = vmatpush1.msra.mxu0 %v1727
      %1748 = vmatprep.subr.mxu0 0.0
      %1749 = vmatpush1.msra.mxu0 0.0
      %1750 = vmatprep.subr.mxu0 0.0
      %1751 = vmatpush1.msra.mxu0 0.0
      %1752 = vmatprep.subr.mxu0 0.0
      %1753 = vmatpush1.msra.mxu0 0.0
      %1754 = vmatprep.subr.mxu0 0.0
      %1755 = vmatpush1.msra.mxu0 0.0
      %1756 = vmatprep.subr.mxu0 0.0
      %1757 = vmatpush1.msra.mxu0 0.0
      %1758 = vmatprep.subr.mxu0 0.0
      %1759 = vmatpush1.msra.mxu0 0.0
      %1760 = vmatprep.subr.mxu0 0.0
      %1761 = vmatpush1.msra.mxu0 0.0
      %1762 = vmatprep.subr.mxu0 0.0
      %1763 = vmatpush1.msra.mxu0 0.0
      %1764 = vmatprep.subr.mxu0 0.0
      %1765 = vmatpush1.msra.mxu0 0.0
      %1766 = vmatprep.subr.mxu0 0.0
      %1767 = vmatpush1.msra.mxu0 0.0
      %1768 = vmatprep.subr.mxu0 0.0
      %1769 = vmatpush1.msra.mxu0 0.0
      %1770 = vmatprep.subr.mxu0 0.0
      %1771 = vmatpush1.msra.mxu0 0.0
      %1772 = vmatprep.subr.mxu0 0.0
      %1773 = vmatpush1.msra.mxu0 0.0
      %1774 = vmatprep.subr.mxu0 0.0
      %1775 = vmatpush1.msra.mxu0 0.0
      %1776 = vmatprep.subr.mxu0 0.0
      %1777 = vmatpush1.msra.mxu0 0.0
      %1778 = vmatprep.subr.mxu0 0.0
      %1779 = vmatpush1.msra.mxu0 0.0
      %1780 = vmatprep.subr.mxu0 0.0
      %1781 = vmatpush1.msra.mxu0 0.0
      %1782 = vmatprep.subr.mxu0 0.0
      %1783 = vmatpush1.msra.mxu0 0.0
      %1784 = vmatprep.subr.mxu0 0.0
      %1785 = vmatpush1.msra.mxu0 0.0
      %1786 = vmatprep.subr.mxu0 0.0
      %1787 = vmatpush1.msra.mxu0 0.0
      %1788 = vmatprep.subr.mxu0 0.0
      %1789 = vmatpush1.msra.mxu0 0.0
      %1790 = vmatprep.subr.mxu0 0.0
      %1791 = vmatpush1.msra.mxu0 0.0
      %1792 = vmatprep.subr.mxu0 0.0
      %1793 = vmatpush1.msra.mxu0 0.0
      %1794 = vmatprep.subr.mxu0 0.0
      %1795 = vmatpush1.msra.mxu0 0.0
      %1796 = vmatprep.subr.mxu0 0.0
      %1797 = vmatpush1.msra.mxu0 0.0
      %1798 = vmatprep.subr.mxu0 0.0
      %1799 = vmatpush1.msra.mxu0 0.0
      %1800 = vmatprep.mubr.f32.mxu0 0.0
      %1801 = vmatmul.mubr.f32.gmra.mrb[0].mxu0 %v1731
      %v1802 = vpop.f32.mrb[0].mxu0
      %v1803 = vadd.f32 0.0, %v1802
      %v1804 = vpop.f32.mrb[0].mxu0
      %v1805 = vadd.f32 0.0, %v1804
      %1806 = vmatprep.mubr.f32.mxu0 0.0
      %1807 = vmatmul.mubr.f32.gmra.mrb[0].mxu0 %v1734
      %v1808 = vpop.f32.mrb[0].mxu0
      %v1809 = vadd.f32 0.0, %v1808
      %v1810 = vpop.f32.mrb[0].mxu0
      %v1811 = vadd.f32 0.0, %v1810
      %1812 = vdwg.mxu0
      %1813 = vmatprep.subr.mxu0 0.0
      %1814 = vmatpush1.msra.mxu0 %v1714
      %1815 = vmatprep.subr.mxu0 0.0
      %1816 = vmatpush1.msra.mxu0 %v1717
      %1817 = vmatprep.subr.mxu0 0.0
      %1818 = vmatpush1.msra.mxu0 %v1720
      %1819 = vmatprep.subr.mxu0 0.0
      %1820 = vmatpush1.msra.mxu0 %v1723
      %1821 = vmatprep.subr.mxu0 0.0
      %1822 = vmatpush1.msra.mxu0 %v1726
      %1823 = vmatprep.subr.mxu0 0.0
      %1824 = vmatpush1.msra.mxu0 %v1729
      %1825 = vmatprep.subr.mxu0 0.0
      %1826 = vmatpush1.msra.mxu0 0.0
      %1827 = vmatprep.subr.mxu0 0.0
      %1828 = vmatpush1.msra.mxu0 0.0
      %1829 = vmatprep.subr.mxu0 0.0
      %1830 = vmatpush1.msra.mxu0 0.0
      %1831 = vmatprep.subr.mxu0 0.0
      %1832 = vmatpush1.msra.mxu0 0.0
      %1833 = vmatprep.subr.mxu0 0.0
      %1834 = vmatpush1.msra.mxu0 0.0
      %1835 = vmatprep.subr.mxu0 0.0
      %1836 = vmatpush1.msra.mxu0 0.0
      %1837 = vmatprep.subr.mxu0 0.0
      %1838 = vmatpush1.msra.mxu0 0.0
      %1839 = vmatprep.subr.mxu0 0.0
      %1840 = vmatpush1.msra.mxu0 0.0
      %1841 = vmatprep.subr.mxu0 0.0
      %1842 = vmatpush1.msra.mxu0 0.0
      %1843 = vmatprep.subr.mxu0 0.0
      %1844 = vmatpush1.msra.mxu0 0.0
      %1845 = vmatprep.subr.mxu0 0.0
      %1846 = vmatpush1.msra.mxu0 0.0
      %1847 = vmatprep.subr.mxu0 0.0
      %1848 = vmatpush1.msra.mxu0 0.0
      %1849 = vmatprep.subr.mxu0 0.0
      %1850 = vmatpush1.msra.mxu0 0.0
      %1851 = vmatprep.subr.mxu0 0.0
      %1852 = vmatpush1.msra.mxu0 0.0
      %1853 = vmatprep.subr.mxu0 0.0
      %1854 = vmatpush1.msra.mxu0 0.0
      %1855 = vmatprep.subr.mxu0 0.0
      %1856 = vmatpush1.msra.mxu0 0.0
      %1857 = vmatprep.subr.mxu0 0.0
      %1858 = vmatpush1.msra.mxu0 0.0
      %1859 = vmatprep.subr.mxu0 0.0
      %1860 = vmatpush1.msra.mxu0 0.0
      %1861 = vmatprep.subr.mxu0 0.0
      %1862 = vmatpush1.msra.mxu0 0.0
      %1863 = vmatprep.subr.mxu0 0.0
      %1864 = vmatpush1.msra.mxu0 0.0
      %1865 = vmatprep.subr.mxu0 0.0
      %1866 = vmatpush1.msra.mxu0 0.0
      %1867 = vmatprep.subr.mxu0 0.0
      %1868 = vmatpush1.msra.mxu0 0.0
      %1869 = vmatprep.subr.mxu0 0.0
      %1870 = vmatpush1.msra.mxu0 0.0
      %1871 = vmatprep.subr.mxu0 0.0
      %1872 = vmatpush1.msra.mxu0 0.0
      %1873 = vmatprep.subr.mxu0 0.0
      %1874 = vmatpush1.msra.mxu0 0.0
      %1875 = vmatprep.subr.mxu0 0.0
      %1876 = vmatpush1.msra.mxu0 0.0
      %1877 = vmatprep.mubr.f32.mxu0 0.0
      %1878 = vmatmul.mubr.f32.gmra.mrb[0].mxu0 %v1731
      %v1879 = vpop.f32.mrb[0].mxu0
      %v1880 = vadd.f32 0.0, %v1879
      %v1881 = vpop.f32.mrb[0].mxu0
      %1882 = vmatprep.mubr.f32.mxu0 0.0
      %1883 = vmatmul.mubr.f32.gmra.mrb[0].mxu0 %v1734
      %v1884 = vpop.f32.mrb[0].mxu0
      %v1885 = vadd.f32 0.0, %v1884
      %v1886 = vpop.f32.mrb[0].mxu0
      %1887 = vdwg.mxu0
      %v1888 = vld [vmem:[%s287] sm:$0xff]
      %v1889 = vld [vmem:[%s287 + $0x8] sm:$0xff]
      %v1890 = vld [vmem:[%s287 + $0x10] sm:$0xff]
      %v1891 = vld [vmem:[%s287 + $0x18] sm:$0xff]
      %v1892 = vld [vmem:[%s287 + $0x20] sm:$0xff]
      %v1893 = vld [vmem:[%s287 + $0x28] sm:$0xff]
      %v1894 = vadd.f32 %v1888, %v1803
      %v1895 = vadd.f32 %v1889, %v1805
      %v1896 = vadd.f32 %v1890, %v1880
      %v1897 = vadd.f32 %v1891, %v1809
      %v1898 = vadd.f32 %v1892, %v1811
      %v1899 = vadd.f32 %v1893, %v1885
      %1900 = vst [vmem:[%s287] sm:$0xff] %v1894
      %1901 = vst [vmem:[%s287 + $0x8] sm:$0xff] %v1895
      %1902 = vst.msk [vmem:[%s287 + $0x10] sm:$0xff] %vm1320, %v1896
      %1903 = vst [vmem:[%s287 + $0x18] sm:$0xff] %v1897
      %1904 = vst [vmem:[%s287 + $0x20] sm:$0xff] %v1898
      %1905 = vst.msk [vmem:[%s287 + $0x28] sm:$0xff] %vm1320, %v1899
      %v1906 = vld [vmem:[#allocation2] sm:$0xff]
      %v1907 = vld [vmem:[#allocation2 + $0x8] sm:$0xff]
      %v1908 = vld [vmem:[#allocation2 + $0x10] sm:$0xff]
      %v1909 = vld [vmem:[#allocation2 + $0x20] sm:$0xff]
      %v1910 = vld [vmem:[#allocation2 + $0x28] sm:$0xff]
      %v1911 = vld [vmem:[#allocation2 + $0x30] sm:$0xff]
      %1918 = vrot.lane.b32.xlu0 %v1906, 88
      %v1919 = vpop.permute.xlu0 %1918
      %1920 = vrot.lane.b32.xlu0 %v1907, 88
      %v1921 = vpop.permute.xlu0 %1920
      %1922 = vrot.lane.b32.xlu0 %v1908, 88
      %v1923 = vpop.permute.xlu0 %1922
      %1924 = vrot.lane.b32.xlu0 %v1909, 88
      %v1925 = vpop.permute.xlu0 %1924
      %1926 = vrot.lane.b32.xlu0 %v1910, 88
      %v1927 = vpop.permute.xlu0 %1926
      %1928 = vrot.lane.b32.xlu0 %v1911, 88
      %v1929 = vpop.permute.xlu0 %1928
      %v1930 = vsel %vm925, %v1919, %v1921
      %v1931 = vsel %vm925, %v1921, %v1923
      %v1932 = vsel %vm925, %v1925, %v1927
      %v1933 = vsel %vm925, %v1927, %v1929
      %1940 = vst [vmem:[#allocation3] sm:$0xff] %v1930
      %1941 = vst [vmem:[#allocation3 + $0x8] sm:$0xff] %v1931
      %1942 = vst.msk [vmem:[#allocation3 + $0x10] sm:$0xff] %vm1320, %v1923
      %1943 = vst [vmem:[#allocation3 + $0x18] sm:$0xff] %v1932
      %1944 = vst [vmem:[#allocation3 + $0x20] sm:$0xff] %v1933
      %1945 = vst.msk [vmem:[#allocation3 + $0x28] sm:$0xff] %vm1320, %v1929
      %v1946 = vld [vmem:[#allocation2] sm:$0xff]
      %v1947 = vld [vmem:[#allocation2 + $0x8] sm:$0xff]
      %v1948 = vld [vmem:[#allocation2 + $0x10] sm:$0xff]
      %v1949 = vld [vmem:[#allocation2 + $0x20] sm:$0xff]
      %v1950 = vld [vmem:[#allocation2 + $0x28] sm:$0xff]
      %v1951 = vld [vmem:[#allocation2 + $0x30] sm:$0xff]
      %1958 = vrot.lane.b32.xlu0 %v1946, 87
      %v1959 = vpop.permute.xlu0 %1958
      %1960 = vrot.lane.b32.xlu0 %v1947, 87
      %v1961 = vpop.permute.xlu0 %1960
      %1962 = vrot.lane.b32.xlu0 %v1948, 87
      %v1963 = vpop.permute.xlu0 %1962
      %1964 = vrot.lane.b32.xlu0 %v1949, 87
      %v1965 = vpop.permute.xlu0 %1964
      %1966 = vrot.lane.b32.xlu0 %v1950, 87
      %v1967 = vpop.permute.xlu0 %1966
      %1968 = vrot.lane.b32.xlu0 %v1951, 87
      %v1969 = vpop.permute.xlu0 %1968
      %v1970 = vsel %vm976, %v1959, %v1961
      %v1971 = vsel %vm976, %v1961, %v1963
      %v1972 = vsel %vm976, %v1965, %v1967
      %v1973 = vsel %vm976, %v1967, %v1969
      %1980 = vst [vmem:[#allocation3 + $0x30] sm:$0xff] %v1970
      %1981 = vst [vmem:[#allocation3 + $0x38] sm:$0xff] %v1971
      %1982 = vst.msk [vmem:[#allocation3 + $0x40] sm:$0xff] %vm1320, %v1963
      %1983 = vst [vmem:[#allocation3 + $0x48] sm:$0xff] %v1972
      %1984 = vst [vmem:[#allocation3 + $0x50] sm:$0xff] %v1973
      %1985 = vst.msk [vmem:[#allocation3 + $0x58] sm:$0xff] %vm1320, %v1969
      %v1986 = vld [vmem:[#allocation2] sm:$0xff]
      %v1987 = vld [vmem:[#allocation2 + $0x8] sm:$0xff]
      %v1988 = vld [vmem:[#allocation2 + $0x10] sm:$0xff]
      %v1989 = vld [vmem:[#allocation2 + $0x20] sm:$0xff]
      %v1990 = vld [vmem:[#allocation2 + $0x28] sm:$0xff]
      %v1991 = vld [vmem:[#allocation2 + $0x30] sm:$0xff]
      %1998 = vrot.lane.b32.xlu0 %v1986, 86
      %v1999 = vpop.permute.xlu0 %1998
      %2000 = vrot.lane.b32.xlu0 %v1987, 86
      %v2001 = vpop.permute.xlu0 %2000
      %2002 = vrot.lane.b32.xlu0 %v1988, 86
      %v2003 = vpop.permute.xlu0 %2002
      %2004 = vrot.lane.b32.xlu0 %v1989, 86
      %v2005 = vpop.permute.xlu0 %2004
      %2006 = vrot.lane.b32.xlu0 %v1990, 86
      %v2007 = vpop.permute.xlu0 %2006
      %2008 = vrot.lane.b32.xlu0 %v1991, 86
      %v2009 = vpop.permute.xlu0 %2008
      %v2010 = vsel %vm1027, %v1999, %v2001
      %v2011 = vsel %vm1027, %v2001, %v2003
      %v2012 = vsel %vm1027, %v2005, %v2007
      %v2013 = vsel %vm1027, %v2007, %v2009
      %2020 = vst [vmem:[#allocation3 + $0x60] sm:$0xff] %v2010
      %2021 = vst [vmem:[#allocation3 + $0x68] sm:$0xff] %v2011
      %2022 = vst.msk [vmem:[#allocation3 + $0x70] sm:$0xff] %vm1320, %v2003
      %2023 = vst [vmem:[#allocation3 + $0x78] sm:$0xff] %v2012
      %2024 = vst [vmem:[#allocation3 + $0x80] sm:$0xff] %v2013
      %2025 = vst.msk [vmem:[#allocation3 + $0x88] sm:$0xff] %vm1320, %v2009
      %s2026 = scalar_lea.vmem %s3, 32
      %v2027 = vld [vmem:[%s2026] sm:$0xff]
      %v2028 = vld [vmem:[%s2026 + $0x8] sm:$0xff]
      %v2029 = vld [vmem:[#allocation3] sm:$0xff]
      %v2030 = vld [vmem:[#allocation3 + $0x8] sm:$0xff]
      %v2031 = vld [vmem:[#allocation3 + $0x10] sm:$0xff]
      %v2032 = vld [vmem:[#allocation3 + $0x18] sm:$0xff]
      %v2033 = vld [vmem:[#allocation3 + $0x20] sm:$0xff]
      %v2034 = vld [vmem:[#allocation3 + $0x28] sm:$0xff]
      %v2035 = vld [vmem:[#allocation3 + $0x30] sm:$0xff]
      %v2036 = vld [vmem:[#allocation3 + $0x38] sm:$0xff]
      %v2037 = vld [vmem:[#allocation3 + $0x40] sm:$0xff]
      %v2038 = vld [vmem:[#allocation3 + $0x48] sm:$0xff]
      %v2039 = vld [vmem:[#allocation3 + $0x50] sm:$0xff]
      %v2040 = vld [vmem:[#allocation3 + $0x58] sm:$0xff]
      %v2041 = vld [vmem:[#allocation3 + $0x60] sm:$0xff]
      %v2042 = vld [vmem:[#allocation3 + $0x68] sm:$0xff]
      %v2043 = vld [vmem:[#allocation3 + $0x70] sm:$0xff]
      %v2044 = vld [vmem:[#allocation3 + $0x78] sm:$0xff]
      %v2045 = vld [vmem:[#allocation3 + $0x80] sm:$0xff]
      %v2046 = vld [vmem:[#allocation3 + $0x88] sm:$0xff]
      %v2048 = vsel %vm408, %v2027, 0
      %v2051 = vsel %vm408, %v2028, 0
      %2053 = vmatprep.subr.mxu0 %v2030
      %2054 = vmatpush1.msra.mxu0 %v2029
      %2055 = vmatprep.subr.mxu0 %v2033
      %2056 = vmatpush1.msra.mxu0 %v2032
      %2057 = vmatprep.subr.mxu0 %v2036
      %2058 = vmatpush1.msra.mxu0 %v2035
      %2059 = vmatprep.subr.mxu0 %v2039
      %2060 = vmatpush1.msra.mxu0 %v2038
      %2061 = vmatprep.subr.mxu0 %v2042
      %2062 = vmatpush1.msra.mxu0 %v2041
      %2063 = vmatprep.subr.mxu0 %v2045
      %2064 = vmatpush1.msra.mxu0 %v2044
      %2065 = vmatprep.subr.mxu0 0.0
      %2066 = vmatpush1.msra.mxu0 0.0
      %2067 = vmatprep.subr.mxu0 0.0
      %2068 = vmatpush1.msra.mxu0 0.0
      %2069 = vmatprep.subr.mxu0 0.0
      %2070 = vmatpush1.msra.mxu0 0.0
      %2071 = vmatprep.subr.mxu0 0.0
      %2072 = vmatpush1.msra.mxu0 0.0
      %2073 = vmatprep.subr.mxu0 0.0
      %2074 = vmatpush1.msra.mxu0 0.0
      %2075 = vmatprep.subr.mxu0 0.0
      %2076 = vmatpush1.msra.mxu0 0.0
      %2077 = vmatprep.subr.mxu0 0.0
      %2078 = vmatpush1.msra.mxu0 0.0
      %2079 = vmatprep.subr.mxu0 0.0
      %2080 = vmatpush1.msra.mxu0 0.0
      %2081 = vmatprep.subr.mxu0 0.0
      %2082 = vmatpush1.msra.mxu0 0.0
      %2083 = vmatprep.subr.mxu0 0.0
      %2084 = vmatpush1.msra.mxu0 0.0
      %2085 = vmatprep.subr.mxu0 0.0
      %2086 = vmatpush1.msra.mxu0 0.0
      %2087 = vmatprep.subr.mxu0 0.0
      %2088 = vmatpush1.msra.mxu0 0.0
      %2089 = vmatprep.subr.mxu0 0.0
      %2090 = vmatpush1.msra.mxu0 0.0
      %2091 = vmatprep.subr.mxu0 0.0
      %2092 = vmatpush1.msra.mxu0 0.0
      %2093 = vmatprep.subr.mxu0 0.0
      %2094 = vmatpush1.msra.mxu0 0.0
      %2095 = vmatprep.subr.mxu0 0.0
      %2096 = vmatpush1.msra.mxu0 0.0
      %2097 = vmatprep.subr.mxu0 0.0
      %2098 = vmatpush1.msra.mxu0 0.0
      %2099 = vmatprep.subr.mxu0 0.0
      %2100 = vmatpush1.msra.mxu0 0.0
      %2101 = vmatprep.subr.mxu0 0.0
      %2102 = vmatpush1.msra.mxu0 0.0
      %2103 = vmatprep.subr.mxu0 0.0
      %2104 = vmatpush1.msra.mxu0 0.0
      %2105 = vmatprep.subr.mxu0 0.0
      %2106 = vmatpush1.msra.mxu0 0.0
      %2107 = vmatprep.subr.mxu0 0.0
      %2108 = vmatpush1.msra.mxu0 0.0
      %2109 = vmatprep.subr.mxu0 0.0
      %2110 = vmatpush1.msra.mxu0 0.0
      %2111 = vmatprep.subr.mxu0 0.0
      %2112 = vmatpush1.msra.mxu0 0.0
      %2113 = vmatprep.subr.mxu0 0.0
      %2114 = vmatpush1.msra.mxu0 0.0
      %2115 = vmatprep.subr.mxu0 0.0
      %2116 = vmatpush1.msra.mxu0 0.0
      %2117 = vmatprep.mubr.f32.mxu0 0.0
      %2118 = vmatmul.mubr.f32.gmra.mrb[0].mxu0 %v2048
      %v2119 = vpop.f32.mrb[0].mxu0
      %v2120 = vadd.f32 0.0, %v2119
      %v2121 = vpop.f32.mrb[0].mxu0
      %v2122 = vadd.f32 0.0, %v2121
      %2123 = vmatprep.mubr.f32.mxu0 0.0
      %2124 = vmatmul.mubr.f32.gmra.mrb[0].mxu0 %v2051
      %v2125 = vpop.f32.mrb[0].mxu0
      %v2126 = vadd.f32 0.0, %v2125
      %v2127 = vpop.f32.mrb[0].mxu0
      %v2128 = vadd.f32 0.0, %v2127
      %2129 = vdwg.mxu0
      %2130 = vmatprep.subr.mxu0 0.0
      %2131 = vmatpush1.msra.mxu0 %v2031
      %2132 = vmatprep.subr.mxu0 0.0
      %2133 = vmatpush1.msra.mxu0 %v2034
      %2134 = vmatprep.subr.mxu0 0.0
      %2135 = vmatpush1.msra.mxu0 %v2037
      %2136 = vmatprep.subr.mxu0 0.0
      %2137 = vmatpush1.msra.mxu0 %v2040
      %2138 = vmatprep.subr.mxu0 0.0
      %2139 = vmatpush1.msra.mxu0 %v2043
      %2140 = vmatprep.subr.mxu0 0.0
      %2141 = vmatpush1.msra.mxu0 %v2046
      %2142 = vmatprep.subr.mxu0 0.0
      %2143 = vmatpush1.msra.mxu0 0.0
      %2144 = vmatprep.subr.mxu0 0.0
      %2145 = vmatpush1.msra.mxu0 0.0
      %2146 = vmatprep.subr.mxu0 0.0
      %2147 = vmatpush1.msra.mxu0 0.0
      %2148 = vmatprep.subr.mxu0 0.0
      %2149 = vmatpush1.msra.mxu0 0.0
      %2150 = vmatprep.subr.mxu0 0.0
      %2151 = vmatpush1.msra.mxu0 0.0
      %2152 = vmatprep.subr.mxu0 0.0
      %2153 = vmatpush1.msra.mxu0 0.0
      %2154 = vmatprep.subr.mxu0 0.0
      %2155 = vmatpush1.msra.mxu0 0.0
      %2156 = vmatprep.subr.mxu0 0.0
      %2157 = vmatpush1.msra.mxu0 0.0
      %2158 = vmatprep.subr.mxu0 0.0
      %2159 = vmatpush1.msra.mxu0 0.0
      %2160 = vmatprep.subr.mxu0 0.0
      %2161 = vmatpush1.msra.mxu0 0.0
      %2162 = vmatprep.subr.mxu0 0.0
      %2163 = vmatpush1.msra.mxu0 0.0
      %2164 = vmatprep.subr.mxu0 0.0
      %2165 = vmatpush1.msra.mxu0 0.0
      %2166 = vmatprep.subr.mxu0 0.0
      %2167 = vmatpush1.msra.mxu0 0.0
      %2168 = vmatprep.subr.mxu0 0.0
      %2169 = vmatpush1.msra.mxu0 0.0
      %2170 = vmatprep.subr.mxu0 0.0
      %2171 = vmatpush1.msra.mxu0 0.0
      %2172 = vmatprep.subr.mxu0 0.0
      %2173 = vmatpush1.msra.mxu0 0.0
      %2174 = vmatprep.subr.mxu0 0.0
      %2175 = vmatpush1.msra.mxu0 0.0
      %2176 = vmatprep.subr.mxu0 0.0
      %2177 = vmatpush1.msra.mxu0 0.0
      %2178 = vmatprep.subr.mxu0 0.0
      %2179 = vmatpush1.msra.mxu0 0.0
      %2180 = vmatprep.subr.mxu0 0.0
      %2181 = vmatpush1.msra.mxu0 0.0
      %2182 = vmatprep.subr.mxu0 0.0
      %2183 = vmatpush1.msra.mxu0 0.0
      %2184 = vmatprep.subr.mxu0 0.0
      %2185 = vmatpush1.msra.mxu0 0.0
      %2186 = vmatprep.subr.mxu0 0.0
      %2187 = vmatpush1.msra.mxu0 0.0
      %2188 = vmatprep.subr.mxu0 0.0
      %2189 = vmatpush1.msra.mxu0 0.0
      %2190 = vmatprep.subr.mxu0 0.0
      %2191 = vmatpush1.msra.mxu0 0.0
      %2192 = vmatprep.subr.mxu0 0.0
      %2193 = vmatpush1.msra.mxu0 0.0
      %2194 = vmatprep.mubr.f32.mxu0 0.0
      %2195 = vmatmul.mubr.f32.gmra.mrb[0].mxu0 %v2048
      %v2196 = vpop.f32.mrb[0].mxu0
      %v2197 = vadd.f32 0.0, %v2196
      %v2198 = vpop.f32.mrb[0].mxu0
      %2199 = vmatprep.mubr.f32.mxu0 0.0
      %2200 = vmatmul.mubr.f32.gmra.mrb[0].mxu0 %v2051
      %v2201 = vpop.f32.mrb[0].mxu0
      %v2202 = vadd.f32 0.0, %v2201
      %v2203 = vpop.f32.mrb[0].mxu0
      %2204 = vdwg.mxu0
      %v2205 = vld [vmem:[%s287] sm:$0xff]
      %v2206 = vld [vmem:[%s287 + $0x8] sm:$0xff]
      %v2207 = vld [vmem:[%s287 + $0x10] sm:$0xff]
      %v2208 = vld [vmem:[%s287 + $0x18] sm:$0xff]
      %v2209 = vld [vmem:[%s287 + $0x20] sm:$0xff]
      %v2210 = vld [vmem:[%s287 + $0x28] sm:$0xff]
      %v2211 = vadd.f32 %v2205, %v2120
      %v2212 = vadd.f32 %v2206, %v2122
      %v2213 = vadd.f32 %v2207, %v2197
      %v2214 = vadd.f32 %v2208, %v2126
      %v2215 = vadd.f32 %v2209, %v2128
      %v2216 = vadd.f32 %v2210, %v2202
      %2217 = vst [vmem:[%s287] sm:$0xff] %v2211
      %2218 = vst [vmem:[%s287 + $0x8] sm:$0xff] %v2212
      %2219 = vst.msk [vmem:[%s287 + $0x10] sm:$0xff] %vm1320, %v2213
      %2220 = vst [vmem:[%s287 + $0x18] sm:$0xff] %v2214
      %2221 = vst [vmem:[%s287 + $0x20] sm:$0xff] %v2215
      %2222 = vst.msk [vmem:[%s287 + $0x28] sm:$0xff] %vm1320, %v2216
      %v2223 = vld [vmem:[%s287] sm:$0xff]
      %v2224 = vld [vmem:[%s287 + $0x8] sm:$0xff]
      %v2225 = vld [vmem:[%s287 + $0x10] sm:$0xff]
      %v2226 = vld [vmem:[%s287 + $0x18] sm:$0xff]
      %v2227 = vld [vmem:[%s287 + $0x20] sm:$0xff]
      %v2228 = vld [vmem:[%s287 + $0x28] sm:$0xff]
      %v2229 = vld [vmem:[%s4] sm:$0xff]
      %v2230 = vld [vmem:[%s4 + $0x8] sm:$0xff]
      %2232 = vset.pattern.permute.xlu0 0
      %2233 = vperm.xlu0 %2232, %v2229
      %v2234 = vpop.permute.xlu0 %2233
      %2237 = vset.pattern.permute.xlu0 0
      %2238 = vperm.xlu0 %2237, %v2230
      %v2239 = vpop.permute.xlu0 %2238
      %v2241 = vadd.f32 %v2223, %v2234
      %v2242 = vadd.f32 %v2224, %v2234
      %v2243 = vadd.f32 %v2225, %v2234
      %v2244 = vadd.f32 %v2226, %v2239
      %v2245 = vadd.f32 %v2227, %v2239
      %v2246 = vadd.f32 %v2228, %v2239
      %v2247 = vld [vmem:[%s278] sm:$0xff]
      %v2248 = vld [vmem:[%s278 + $0x8] sm:$0xff]
      %v2249 = vld [vmem:[%s278 + $0x10] sm:$0xff]
      %v2250 = vld [vmem:[%s278 + $0x28] sm:$0xff]
      %v2251 = vld [vmem:[%s278 + $0x30] sm:$0xff]
      %v2252 = vld [vmem:[%s278 + $0x38] sm:$0xff]
      %2259 = vrot.lane.b32.xlu0 %v2247, 86
      %v2260 = vpop.permute.xlu0 %2259
      %2261 = vrot.lane.b32.xlu0 %v2248, 86
      %v2262 = vpop.permute.xlu0 %2261
      %2263 = vrot.lane.b32.xlu0 %v2249, 86
      %v2264 = vpop.permute.xlu0 %2263
      %2265 = vrot.lane.b32.xlu0 %v2250, 86
      %v2266 = vpop.permute.xlu0 %2265
      %2267 = vrot.lane.b32.xlu0 %v2251, 86
      %v2268 = vpop.permute.xlu0 %2267
      %2269 = vrot.lane.b32.xlu0 %v2252, 86
      %v2270 = vpop.permute.xlu0 %2269
      %v2271 = vsel %vm1027, %v2260, %v2262
      %v2272 = vsel %vm1027, %v2262, %v2264
      %v2273 = vsel %vm1027, %v2266, %v2268
      %v2274 = vsel %vm1027, %v2268, %v2270
      %v2281 = vadd.f32 %v2241, %v2271
      %v2282 = vadd.f32 %v2242, %v2272
      %v2283 = vadd.f32 %v2243, %v2264
      %v2284 = vadd.f32 %v2244, %v2273
      %v2285 = vadd.f32 %v2245, %v2274
      %v2286 = vadd.f32 %v2246, %v2270
      %2287 = vst [vmem:[%s287] sm:$0xff] %v2281
      %2288 = vst [vmem:[%s287 + $0x8] sm:$0xff] %v2282
      %2289 = vst.msk [vmem:[%s287 + $0x10] sm:$0xff] %vm1320, %v2283
      %2290 = vst [vmem:[%s287 + $0x18] sm:$0xff] %v2284
      %2291 = vst [vmem:[%s287 + $0x20] sm:$0xff] %v2285
      %2292 = vst.msk [vmem:[%s287 + $0x28] sm:$0xff] %vm1320, %v2286
      %p2293 = scmp.lt.s32.totalorder %s21, 1
      %s2294 = scalar_select %p2293, %s21, 1
      %p2295 = scmp.lt.s32.totalorder %s22, 0
      %s2296 = scalar_select %p2295, %s22, 0
      %s2297 = smul.addr %s2296, 6
      %s2298 = smul.addr %s2294, 6
      %s2299 = sadd.s32 %s2297, %s2298
      %s2300 = smul.addr %s2299, 8
      %s2301 = scalar_lea.vmem %s6, %s2300
      // Predicated region
      $region49: #{residual_block_nobn.1} parent=43 // pred_check
        %p2302 = pneg %p182
      $region50: #{residual_block_nobn.1} parent=43 // pred_check_branch
        %2304 = sbr.rel (%p2302) target = $region52
      $region51: #{residual_block_nobn.1} parent=43 // pred_region
        _
      $region52: #{residual_block_nobn.1} parent=43 // pred_fallthru
        _
    $region44: #{residual_block_nobn.1} parent=5 // pred_fallthru
      _
    %p2305 = scmp.le.s32.totalorder 2, %s12
    // Predicated region
    $region53: #{residual_block_nobn.1} parent=5 // pred_check
      %p2306 = pneg %p2305
    $region54: #{residual_block_nobn.1} parent=5 // pred_check_branch
      %2308 = sbr.rel (%p2306) target = $region56
    $region55: #{residual_block_nobn.1} parent=5 // pred_region
      %s2309 = ssub.s32 %s12, 2
      // Predicated region
      $region57: #{residual_block_nobn.1} parent=55 // pred_check
        %p2310 = pneg %p188
      $region58: #{residual_block_nobn.1} parent=55 // pred_check_branch
        %2312 = sbr.rel (%p2310) target = $region60
      $region59: #{residual_block_nobn.1} parent=55 // pred_region
        %p2313 = scmp.lt.s32.totalorder %s23, 1
        %s2314 = scalar_select %p2313, %s23, 1
        %p2315 = scmp.lt.s32.totalorder %s24, 0
        %s2316 = scalar_select %p2315, %s24, 0
        %s2317 = smul.addr %s2316, 6
        %s2318 = smul.addr %s2314, 6
        %s2319 = sadd.s32 %s2317, %s2318
        %s2320 = smul.addr %s2319, 8
        %s2321 = scalar_lea.vmem %s6, %s2320
      $region60: #{residual_block_nobn.1} parent=55 // pred_fallthru
        _
    $region56: #{residual_block_nobn.1} parent=5 // pred_fallthru
      _
  $region6: #{residual_block_nobn.1} parent=0 // loop_footer
    %s16 = sadd.s32 1, %s12
  $region7: #{residual_block_nobn.1} parent=0 // loop_footer_branch
    %11 = sbr.rel target = $region3
  $region8: #{residual_block_nobn.1} parent=0 // loop_exit
    _

</llo_original>
